<compile_context>
chip_gen: v5e
topology: v5e:2x2
jax: 0.10.0
libtpu: 0.0.40
codegen_flags: <defaults>
</compile_context>

<pallas_src>
import jax
import jax.numpy as jnp
from jax.experimental import pallas as pl
from jax.experimental.pallas import tpu as pltpu

BN_EPS = 1e-5


def _round_up(x, m):
    return ((x + m - 1) // m) * m


def _make_conv_acc(K, stride, Ho, Wo, Cin_p, Cout_p):
    """Per-image conv accumulator (Ho*Wo, Cout_p) f32 from an NHWC padded image
    ref (Hp, Wp, Cin_p) and a (K*K, Cin_p, Cout_p) weight ref, as K*K shifted
    sub-tile matmuls (in-kernel im2col: no HBM patches materialization)."""

    def conv_acc(x_ref, w_ref):
        x = x_ref[...]                                        # (Hp, Wp, Cin_p) bf16
        acc = jnp.zeros((Ho * Wo, Cout_p), jnp.float32)
        for ki in range(K):
            for kj in range(K):
                if stride == 1:
                    a = x[ki:ki + Ho, kj:kj + Wo, :]          # (Ho, Wo, Cin_p)
                else:
                    # TODO(synk): strided in-kernel slice path is untested on all
                    # Mosaic versions; default module config (stride=1) avoids it.
                    a = jax.lax.slice(
                        x, (ki, kj, 0),
                        (ki + stride * (Ho - 1) + 1,
                         kj + stride * (Wo - 1) + 1, Cin_p),
                        (stride, stride, 1))
                a2 = a.reshape(Ho * Wo, Cin_p)                # collapse leading dims, lane dim unchanged
                acc = acc + jnp.dot(a2, w_ref[ki * K + kj],
                                    preferred_element_type=jnp.float32)
        return acc

    return conv_acc


def _make_stats_kernel(conv_acc):
    """Pass 1: per-image partial BN stats (sum, sumsq) — no carried accumulator,
    so the grid axis can be 'parallel'. Padded Cout columns are all-zero."""

    def kernel(x_ref, w_ref, stats_ref):
        acc = conv_acc(x_ref, w_ref)                          # (Ho*Wo, Cout_p) f32
        stats_ref[0:1, :] = jnp.sum(acc, axis=0, keepdims=True)
        stats_ref[1:2, :] = jnp.sum(acc * acc, axis=0, keepdims=True)

    return kernel


def _make_norm_kernel(conv_acc, Cout):
    """Pass 2: recompute conv, fused affine BN (precomputed scale/shift) + ReLU,
    transpose in-kernel and store the real Cout channels in NCHW-major layout
    (lane dim = Ho*Wo, lane-dense)."""

    def kernel(x_ref, w_ref, scale_ref, shift_ref, o_ref):
        acc = conv_acc(x_ref, w_ref)                          # (Ho*Wo, Cout_p) f32
        y = jnp.maximum(acc * scale_ref[...] + shift_ref[...], 0.0)
        o_ref[...] = y.T[:Cout, :].astype(o_ref.dtype)        # (Cout, Ho*Wo)

    return kernel


def conv_bn_relu(x, weight, gamma, beta, *, stride=1, pad=1):
    """x: (N, C_in, H, W) NCHW; weight: (C_out, C_in, K, K) OIHW (PyTorch).
    Returns (N, C_out, Ho, Wo) NCHW float32 (training-mode BN batch stats)."""
    N, Cin, H, W = x.shape
    Cout, Cin_w, K, _ = weight.shape
    assert Cin == Cin_w

    Hp, Wp = H + 2 * pad, W + 2 * pad
    Ho = (H + 2 * pad - K) // stride + 1
    Wo = (W + 2 * pad - K) // stride + 1
    M_img = Ho * Wo
    M = N * M_img

    Cin_p = _round_up(Cin, 8)          # contraction sublane friendliness (cheap)
    Cout_p = _round_up(Cout, 128)      # full MXU / lane-dense math tiles (do NOT pad to 256)

    # ---- wrapper-side prep (one input round trip; small vs. everything else) ----
    # TODO(synk): fold the NCHW->NHWC transpose + spatial pad into the kernel
    # (masked halo loads) to save this input round trip as well.
    xh = jnp.transpose(x, (0, 2, 3, 1))
    xh = jnp.pad(xh, ((0, 0), (pad, pad), (pad, pad), (0, Cin_p - Cin)))
    xh = xh.astype(jnp.bfloat16)                              # (N, Hp, Wp, Cin_p)

    w_t = jnp.transpose(weight, (2, 3, 1, 0)).reshape(K * K, Cin, Cout)
    w_t = jnp.pad(w_t, ((0, 0), (0, Cin_p - Cin), (0, Cout_p - Cout)))
    w_t = w_t.astype(jnp.bfloat16)                            # (K*K, Cin_p, Cout_p)

    conv_acc = _make_conv_acc(K, stride, Ho, Wo, Cin_p, Cout_p)

    # ---- VMEM-aware limit: whole padded image per grid step, double-buffered ----
    # TODO(synk): for very large images (block >> VMEM, e.g. >512x640 at Cin>=64
    # on v7x's 64 MiB) switch to a (N, row-block) grid with manual halo DMA.
    def _padded_bytes(shape, itemsize, sublane):
        s = list(shape)
        s[-1] = _round_up(s[-1], 128)
        s[-2] = _round_up(s[-2], sublane)
        n = 1
        for d in s:
            n *= d
        return n * itemsize

    est = (2 * _padded_bytes((Hp, Wp, Cin_p), 2, 16)          # image block, double-buffered
           + 2 * _padded_bytes((K * K, Cin_p, Cout_p), 2, 16) # resident weights
           + 2 * _padded_bytes((Cout, M_img), 4, 8)           # output tile
           + 2 * _padded_bytes((M_img, Cout_p), 4, 8))        # f32 accumulator + slack
    vmem_limit = int(min(max(4 * est, 32 * 2 ** 20), 48 * 2 ** 20))

    cparams = pltpu.CompilerParams(
        dimension_semantics=("parallel",),                    # per-image, no carried deps
        vmem_limit_bytes=vmem_limit)

    # ---------------- Pass 1: conv (in-kernel im2col) + partial stats ----------------
    stats = pl.pallas_call(
        _make_stats_kernel(conv_acc),
        out_shape=jax.ShapeDtypeStruct((N, 2, Cout_p), jnp.float32),
        grid_spec=pltpu.PrefetchScalarGridSpec(
            num_scalar_prefetch=0,
            grid=(N,),
            in_specs=[
                pl.BlockSpec((None, Hp, Wp, Cin_p), lambda n: (n, 0, 0, 0)),
                pl.BlockSpec((K * K, Cin_p, Cout_p), lambda n: (0, 0, 0)),
            ],
            out_specs=pl.BlockSpec((None, 2, Cout_p), lambda n: (n, 0, 0)),
        ),
        compiler_params=cparams,
    )(xh, w_t)

    # ---- tiny per-channel epilogue in plain JAX (2*N*Cout_p values) ----
    # TODO(synk): switch to shifted-sum variance if conv activations ever have
    # |mean| >> std (E[x^2]-E[x]^2 cancellation in f32).
    sums = jnp.sum(stats[:, 0, :], axis=0)                    # (Cout_p,)
    sqs = jnp.sum(stats[:, 1, :], axis=0)
    mean = sums / M
    var = jnp.maximum(sqs / M - mean * mean, 0.0)             # biased variance (BN)
    inv = jax.lax.rsqrt(var + BN_EPS)
    gamma_p = jnp.pad(gamma, (0, Cout_p - Cout))
    beta_p = jnp.pad(beta, (0, Cout_p - Cout))
    scale = (gamma_p * inv).reshape(1, Cout_p).astype(jnp.float32)   # padded ch -> 0
    shift = (beta_p - mean * gamma_p * inv).reshape(1, Cout_p).astype(jnp.float32)
    # TODO(synk): BatchNorm running_mean/running_var buffer updates (training
    # side effect) are not produced; only the forward output is computed.

    # ---------------- Pass 2: recompute conv, fused BN affine + ReLU, NCHW store ----------------
    out3 = pl.pallas_call(
        _make_norm_kernel(conv_acc, Cout),
        out_shape=jax.ShapeDtypeStruct((N, Cout, M_img), jnp.float32),
        grid_spec=pltpu.PrefetchScalarGridSpec(
            num_scalar_prefetch=0,
            grid=(N,),
            in_specs=[
                pl.BlockSpec((None, Hp, Wp, Cin_p), lambda n: (n, 0, 0, 0)),
                pl.BlockSpec((K * K, Cin_p, Cout_p), lambda n: (0, 0, 0)),
                pl.BlockSpec((1, Cout_p), lambda n: (0, 0)),
                pl.BlockSpec((1, Cout_p), lambda n: (0, 0)),
            ],
            out_specs=pl.BlockSpec((None, Cout, M_img), lambda n: (n, 0, 0)),
        ),
        compiler_params=cparams,
    )(xh, w_t, scale, shift)

    # (N, Cout, Ho*Wo) -> (N, Cout, Ho, Wo): free row-major split, no data movement.
    return out3.reshape(N, Cout, Ho, Wo)


def _reference(x, weight, gamma, beta, *, stride=1, pad=1, conv_dtype=jnp.float32):
    conv = jax.lax.conv_general_dilated(
        x.astype(conv_dtype), weight.astype(conv_dtype),
        window_strides=(stride, stride),
        padding=[(pad, pad), (pad, pad)],
        dimension_numbers=("NCHW", "OIHW", "NCHW"),
        preferred_element_type=jnp.float32)
    mean = conv.mean(axis=(0, 2, 3), keepdims=True)
    var = conv.var(axis=(0, 2, 3), keepdims=True)  # biased, matches BN normalization
    y = (conv - mean) * jax.lax.rsqrt(var + BN_EPS)
    y = y * gamma.reshape(1, -1, 1, 1) + beta.reshape(1, -1, 1, 1)
    return jnp.maximum(y, 0.0)


if __name__ == "__main__":
    # Small shapes: batch=2, in_channels=4, out_channels=8, spatial=16x16,
    # kernel_size=3, stride=1, pad=1 (ConvBnReLU defaults).
    N, Cin, Cout, H, W, K = 2, 4, 8, 16, 16, 3

    key = jax.random.PRNGKey(0)
    kx, kw, kg, kb = jax.random.split(key, 4)
    x = jax.random.normal(kx, (N, Cin, H, W), dtype=jnp.float32)
    weight = jax.random.normal(kw, (Cout, Cin, K, K), dtype=jnp.float32) * 0.1
    gamma = 1.0 + 0.1 * jax.random.normal(kg, (Cout,), dtype=jnp.float32)
    beta = 0.1 * jax.random.normal(kb, (Cout,), dtype=jnp.float32)

    out = conv_bn_relu(x, weight, gamma, beta, stride=1, pad=1)
    out = jax.block_until_ready(out)
    assert out.shape == (N, Cout, H, W)

    # Tight check vs. a reference using the same bf16 conv operands / f32 accum
    # (isolates in-kernel im2col, padding, transpose and stats correctness).
    ref_bf16 = _reference(x, weight, gamma, beta, stride=1, pad=1,
                          conv_dtype=jnp.bfloat16)
    err = float(jnp.max(jnp.abs(out - ref_bf16)))
    assert jnp.allclose(out, ref_bf16, rtol=1e-3, atol=1e-3), err

    # Loose check vs. the full-f32 (PyTorch-equivalent) path; bf16 MXU operands
    # introduce ~1e-2-level absolute error on the normalized output.
    ref_f32 = _reference(x, weight, gamma, beta, stride=1, pad=1,
                         conv_dtype=jnp.float32)
    err32 = float(jnp.max(jnp.abs(out - ref_f32)))
    assert jnp.allclose(out, ref_f32, rtol=0.0, atol=0.1), err32

    print("KERNEL_OK")
</pallas_src>

<mosaic_0001>
module attributes {stable_mosaic.version = 11 : i64} {
  func.func @kernel(%arg0: i32, %arg1: memref<1x18x18x8xbf16, #tpu.memory_space<vmem>>, %arg2: memref<9x8x128xbf16, #tpu.memory_space<vmem>>, %arg3: memref<1x2x128xf32, #tpu.memory_space<vmem>>) attributes {dimension_semantics = [#tpu.dimension_semantics<parallel>], iteration_bounds = array<i64: 2>, scalar_prefetch = 0 : i64, scratch_operands = 0 : i64, tpu.core_type = #tpu.core_type<tc>, window_params = [{transform_indices = @transform_0, window_bounds = array<i64: 1, 18, 18, 8>}, {pipeline_mode = #tpu.pipeline_mode<synchronous>, transform_indices = @transform_1, window_bounds = array<i64: 9, 8, 128>}, {transform_indices = @transform_2, window_bounds = array<i64: 1, 2, 128>}]} {
    %c0 = arith.constant 0 : index
    %c0_0 = arith.constant 0 : index
    %c0_1 = arith.constant 0 : index
    %c0_2 = arith.constant 0 : index
    %0 = vector.load %arg1[%c0, %c0_0, %c0_1, %c0_2] : memref<1x18x18x8xbf16, #tpu.memory_space<vmem>>, vector<1x18x18x8xbf16>
    %1 = vector.shape_cast %0 : vector<1x18x18x8xbf16> to vector<18x18x8xbf16>
    %cst = arith.constant 0.000000e+00 : f32
    %2 = vector.broadcast %cst : f32 to vector<256x128xf32>
    %3 = vector.extract_strided_slice %1 {offsets = [0, 0, 0], sizes = [16, 16, 8], strides = [1, 1, 1]} : vector<18x18x8xbf16> to vector<16x16x8xbf16>
    %4 = vector.shape_cast %3 : vector<16x16x8xbf16> to vector<256x8xbf16>
    %c0_3 = arith.constant 0 : index
    %c0_4 = arith.constant 0 : index
    %c0_5 = arith.constant 0 : index
    %5 = vector.load %arg2[%c0_3, %c0_4, %c0_5] : memref<9x8x128xbf16, #tpu.memory_space<vmem>>, vector<1x8x128xbf16>
    %6 = vector.shape_cast %5 : vector<1x8x128xbf16> to vector<8x128xbf16>
    %cst_6 = arith.constant dense<0.000000e+00> : vector<256x128xf32>
    %7 = tpu.matmul %4, %6, %cst_6 {dimension_numbers = #tpu.dot_dimension_numbers<[1], [0], [0], [1], [0, 0, 1, 1], [], []>} : vector<256x8xbf16>, vector<8x128xbf16>, vector<256x128xf32> -> vector<256x128xf32>
    %8 = arith.addf %2, %7 : vector<256x128xf32>
    %9 = vector.extract_strided_slice %1 {offsets = [0, 1, 0], sizes = [16, 16, 8], strides = [1, 1, 1]} : vector<18x18x8xbf16> to vector<16x16x8xbf16>
    %10 = vector.shape_cast %9 : vector<16x16x8xbf16> to vector<256x8xbf16>
    %c1 = arith.constant 1 : index
    %c0_7 = arith.constant 0 : index
    %c0_8 = arith.constant 0 : index
    %11 = vector.load %arg2[%c1, %c0_7, %c0_8] : memref<9x8x128xbf16, #tpu.memory_space<vmem>>, vector<1x8x128xbf16>
    %12 = vector.shape_cast %11 : vector<1x8x128xbf16> to vector<8x128xbf16>
    %cst_9 = arith.constant dense<0.000000e+00> : vector<256x128xf32>
    %13 = tpu.matmul %10, %12, %cst_9 {dimension_numbers = #tpu.dot_dimension_numbers<[1], [0], [0], [1], [0, 0, 1, 1], [], []>} : vector<256x8xbf16>, vector<8x128xbf16>, vector<256x128xf32> -> vector<256x128xf32>
    %14 = arith.addf %8, %13 : vector<256x128xf32>
    %15 = vector.extract_strided_slice %1 {offsets = [0, 2, 0], sizes = [16, 16, 8], strides = [1, 1, 1]} : vector<18x18x8xbf16> to vector<16x16x8xbf16>
    %16 = vector.shape_cast %15 : vector<16x16x8xbf16> to vector<256x8xbf16>
    %c2 = arith.constant 2 : index
    %c0_10 = arith.constant 0 : index
    %c0_11 = arith.constant 0 : index
    %17 = vector.load %arg2[%c2, %c0_10, %c0_11] : memref<9x8x128xbf16, #tpu.memory_space<vmem>>, vector<1x8x128xbf16>
    %18 = vector.shape_cast %17 : vector<1x8x128xbf16> to vector<8x128xbf16>
    %cst_12 = arith.constant dense<0.000000e+00> : vector<256x128xf32>
    %19 = tpu.matmul %16, %18, %cst_12 {dimension_numbers = #tpu.dot_dimension_numbers<[1], [0], [0], [1], [0, 0, 1, 1], [], []>} : vector<256x8xbf16>, vector<8x128xbf16>, vector<256x128xf32> -> vector<256x128xf32>
    %20 = arith.addf %14, %19 : vector<256x128xf32>
    %21 = vector.extract_strided_slice %1 {offsets = [1, 0, 0], sizes = [16, 16, 8], strides = [1, 1, 1]} : vector<18x18x8xbf16> to vector<16x16x8xbf16>
    %22 = vector.shape_cast %21 : vector<16x16x8xbf16> to vector<256x8xbf16>
    %c3 = arith.constant 3 : index
    %c0_13 = arith.constant 0 : index
    %c0_14 = arith.constant 0 : index
    %23 = vector.load %arg2[%c3, %c0_13, %c0_14] : memref<9x8x128xbf16, #tpu.memory_space<vmem>>, vector<1x8x128xbf16>
    %24 = vector.shape_cast %23 : vector<1x8x128xbf16> to vector<8x128xbf16>
    %cst_15 = arith.constant dense<0.000000e+00> : vector<256x128xf32>
    %25 = tpu.matmul %22, %24, %cst_15 {dimension_numbers = #tpu.dot_dimension_numbers<[1], [0], [0], [1], [0, 0, 1, 1], [], []>} : vector<256x8xbf16>, vector<8x128xbf16>, vector<256x128xf32> -> vector<256x128xf32>
    %26 = arith.addf %20, %25 : vector<256x128xf32>
    %27 = vector.extract_strided_slice %1 {offsets = [1, 1, 0], sizes = [16, 16, 8], strides = [1, 1, 1]} : vector<18x18x8xbf16> to vector<16x16x8xbf16>
    %28 = vector.shape_cast %27 : vector<16x16x8xbf16> to vector<256x8xbf16>
    %c4 = arith.constant 4 : index
    %c0_16 = arith.constant 0 : index
    %c0_17 = arith.constant 0 : index
    %29 = vector.load %arg2[%c4, %c0_16, %c0_17] : memref<9x8x128xbf16, #tpu.memory_space<vmem>>, vector<1x8x128xbf16>
    %30 = vector.shape_cast %29 : vector<1x8x128xbf16> to vector<8x128xbf16>
    %cst_18 = arith.constant dense<0.000000e+00> : vector<256x128xf32>
    %31 = tpu.matmul %28, %30, %cst_18 {dimension_numbers = #tpu.dot_dimension_numbers<[1], [0], [0], [1], [0, 0, 1, 1], [], []>} : vector<256x8xbf16>, vector<8x128xbf16>, vector<256x128xf32> -> vector<256x128xf32>
    %32 = arith.addf %26, %31 : vector<256x128xf32>
    %33 = vector.extract_strided_slice %1 {offsets = [1, 2, 0], sizes = [16, 16, 8], strides = [1, 1, 1]} : vector<18x18x8xbf16> to vector<16x16x8xbf16>
    %34 = vector.shape_cast %33 : vector<16x16x8xbf16> to vector<256x8xbf16>
    %c5 = arith.constant 5 : index
    %c0_19 = arith.constant 0 : index
    %c0_20 = arith.constant 0 : index
    %35 = vector.load %arg2[%c5, %c0_19, %c0_20] : memref<9x8x128xbf16, #tpu.memory_space<vmem>>, vector<1x8x128xbf16>
    %36 = vector.shape_cast %35 : vector<1x8x128xbf16> to vector<8x128xbf16>
    %cst_21 = arith.constant dense<0.000000e+00> : vector<256x128xf32>
    %37 = tpu.matmul %34, %36, %cst_21 {dimension_numbers = #tpu.dot_dimension_numbers<[1], [0], [0], [1], [0, 0, 1, 1], [], []>} : vector<256x8xbf16>, vector<8x128xbf16>, vector<256x128xf32> -> vector<256x128xf32>
    %38 = arith.addf %32, %37 : vector<256x128xf32>
    %39 = vector.extract_strided_slice %1 {offsets = [2, 0, 0], sizes = [16, 16, 8], strides = [1, 1, 1]} : vector<18x18x8xbf16> to vector<16x16x8xbf16>
    %40 = vector.shape_cast %39 : vector<16x16x8xbf16> to vector<256x8xbf16>
    %c6 = arith.constant 6 : index
    %c0_22 = arith.constant 0 : index
    %c0_23 = arith.constant 0 : index
    %41 = vector.load %arg2[%c6, %c0_22, %c0_23] : memref<9x8x128xbf16, #tpu.memory_space<vmem>>, vector<1x8x128xbf16>
    %42 = vector.shape_cast %41 : vector<1x8x128xbf16> to vector<8x128xbf16>
    %cst_24 = arith.constant dense<0.000000e+00> : vector<256x128xf32>
    %43 = tpu.matmul %40, %42, %cst_24 {dimension_numbers = #tpu.dot_dimension_numbers<[1], [0], [0], [1], [0, 0, 1, 1], [], []>} : vector<256x8xbf16>, vector<8x128xbf16>, vector<256x128xf32> -> vector<256x128xf32>
    %44 = arith.addf %38, %43 : vector<256x128xf32>
    %45 = vector.extract_strided_slice %1 {offsets = [2, 1, 0], sizes = [16, 16, 8], strides = [1, 1, 1]} : vector<18x18x8xbf16> to vector<16x16x8xbf16>
    %46 = vector.shape_cast %45 : vector<16x16x8xbf16> to vector<256x8xbf16>
    %c7 = arith.constant 7 : index
    %c0_25 = arith.constant 0 : index
    %c0_26 = arith.constant 0 : index
    %47 = vector.load %arg2[%c7, %c0_25, %c0_26] : memref<9x8x128xbf16, #tpu.memory_space<vmem>>, vector<1x8x128xbf16>
    %48 = vector.shape_cast %47 : vector<1x8x128xbf16> to vector<8x128xbf16>
    %cst_27 = arith.constant dense<0.000000e+00> : vector<256x128xf32>
    %49 = tpu.matmul %46, %48, %cst_27 {dimension_numbers = #tpu.dot_dimension_numbers<[1], [0], [0], [1], [0, 0, 1, 1], [], []>} : vector<256x8xbf16>, vector<8x128xbf16>, vector<256x128xf32> -> vector<256x128xf32>
    %50 = arith.addf %44, %49 : vector<256x128xf32>
    %51 = vector.extract_strided_slice %1 {offsets = [2, 2, 0], sizes = [16, 16, 8], strides = [1, 1, 1]} : vector<18x18x8xbf16> to vector<16x16x8xbf16>
    %52 = vector.shape_cast %51 : vector<16x16x8xbf16> to vector<256x8xbf16>
    %c8 = arith.constant 8 : index
    %c0_28 = arith.constant 0 : index
    %c0_29 = arith.constant 0 : index
    %53 = vector.load %arg2[%c8, %c0_28, %c0_29] : memref<9x8x128xbf16, #tpu.memory_space<vmem>>, vector<1x8x128xbf16>
    %54 = vector.shape_cast %53 : vector<1x8x128xbf16> to vector<8x128xbf16>
    %cst_30 = arith.constant dense<0.000000e+00> : vector<256x128xf32>
    %55 = tpu.matmul %52, %54, %cst_30 {dimension_numbers = #tpu.dot_dimension_numbers<[1], [0], [0], [1], [0, 0, 1, 1], [], []>} : vector<256x8xbf16>, vector<8x128xbf16>, vector<256x128xf32> -> vector<256x128xf32>
    %56 = arith.addf %50, %55 : vector<256x128xf32>
    %cst_31 = arith.constant dense<0.000000e+00> : vector<128xf32>
    %57 = vector.multi_reduction <add>, %56, %cst_31 [0] : vector<256x128xf32> to vector<128xf32>
    %58 = vector.shape_cast %57 : vector<128xf32> to vector<1x128xf32>
    %c0_32 = arith.constant 0 : index
    %c0_33 = arith.constant 0 : index
    %c0_34 = arith.constant 0 : index
    %59 = vector.load %arg3[%c0_32, %c0_33, %c0_34] : memref<1x2x128xf32, #tpu.memory_space<vmem>>, vector<1x1x128xf32>
    %60 = vector.shape_cast %59 : vector<1x1x128xf32> to vector<1x128xf32>
    %61 = vector.shape_cast %58 : vector<1x128xf32> to vector<1x1x128xf32>
    tpu.vector_store %arg3[%c0_32, %c0_33, %c0_34], %61 {strides = array<i32>} : memref<1x2x128xf32, #tpu.memory_space<vmem>>, vector<1x1x128xf32>,
    %62 = arith.mulf %56, %56 : vector<256x128xf32>
    %cst_35 = arith.constant dense<0.000000e+00> : vector<128xf32>
    %63 = vector.multi_reduction <add>, %62, %cst_35 [0] : vector<256x128xf32> to vector<128xf32>
    %64 = vector.shape_cast %63 : vector<128xf32> to vector<1x128xf32>
    %c0_36 = arith.constant 0 : index
    %c1_37 = arith.constant 1 : index
    %c0_38 = arith.constant 0 : index
    %65 = vector.load %arg3[%c0_36, %c1_37, %c0_38] : memref<1x2x128xf32, #tpu.memory_space<vmem>>, vector<1x1x128xf32>
    %66 = vector.shape_cast %65 : vector<1x1x128xf32> to vector<1x128xf32>
    %67 = vector.shape_cast %64 : vector<1x128xf32> to vector<1x1x128xf32>
    tpu.vector_store %arg3[%c0_36, %c1_37, %c0_38], %67 {strides = array<i32>} : memref<1x2x128xf32, #tpu.memory_space<vmem>>, vector<1x1x128xf32>,
    return
  }
  func.func @transform_0(%arg0: i32) -> (i32, i32, i32, i32) {
    %c0_i32 = arith.constant 0 : i32
    %c0_i32_0 = arith.constant 0 : i32
    %c0_i32_1 = arith.constant 0 : i32
    %c0_i32_2 = arith.constant 0 : i32
    return %arg0, %c0_i32, %c0_i32_0, %c0_i32_1 : i32, i32, i32, i32
  }
  func.func @transform_1(%arg0: i32) -> (i32, i32, i32) {
    %c0_i32 = arith.constant 0 : i32
    %c0_i32_0 = arith.constant 0 : i32
    %c0_i32_1 = arith.constant 0 : i32
    %c0_i32_2 = arith.constant 0 : i32
    return %c0_i32, %c0_i32_0, %c0_i32_1 : i32, i32, i32
  }
  func.func @transform_2(%arg0: i32) -> (i32, i32, i32) {
    %c0_i32 = arith.constant 0 : i32
    %c0_i32_0 = arith.constant 0 : i32
    %c0_i32_1 = arith.constant 0 : i32
    return %arg0, %c0_i32, %c0_i32_0 : i32, i32, i32
  }
}

</mosaic_0001>

<llo_original>
// kernel: tpu_custom_call.1
$region0: #{tpu_custom_call.1}
  #allocation0 [shape = 'u32[]', space=smem, size = 0x4, offset = 0x4, fixed_abs, tag = 'smem constant byte address 0x4 - core index']
  #allocation1 [shape = 'u32[72,128]{1,0:T(1,128)}', space=vmem, size = 0x9000, scoped, tag = 'internal scratch']
  %s0 = inlined_call_operand.vmem [shape: bf16[2,18,18,8], index: 0, kind: input, shape index: {}]
  %s1 = inlined_call_operand.vmem [shape: bf16[9,8,128], index: 1, kind: input, shape index: {}]
  %s2 = inlined_call_operand.hbm [shape: f32[2,2,128], index: 2, kind: output, shape index: {}]
  %s3 = sld [smem:[#allocation0]]
  $region41: #{tpu_custom_call.1} parent=0
    _
  %s5 = ssub.s32 1, %s3
  %s6 = scalar_select 0, %s5, %s3
  $region1: #{tpu_custom_call.1} parent=0
    #allocation2 [shape = 'u8[2048]{0}', space=vmem, size = 0x800, scoped, tag = 'output window, operand 0']
    #allocation3 [shape = 's32[2]{0}', space=sflag, size = 0x8, scoped, tag = 'scoped memory for tpu_custom_call.1']
    %7 = vsyncpa [#allocation3], 0
    %s8 = scalar_lea.sflag [#allocation3], 1
    %9 = vsyncpa %s8, 0
    loop: start=0, step=1, limit=4
    $region2: #{tpu_custom_call.1} parent=1 // loop_pre_header
      _
    $region3: #{tpu_custom_call.1} parent=1 // loop_header
      %s11 = sphi 0, %s15
      %p12 = scmp.ge.s32.totalorder %s11, 4
      %s21 = sphi 0, %s23
      %s24 = sphi 0, %s21
      %s25 = sphi 0, %s24
      %s41 = sphi 0, %s25
      %s45 = sphi 0, %s45
      %s47 = sphi 0, %s45
      %s48 = sphi 0, %s47
      %s62 = sphi 0, %s48
      %s68 = sphi 0, %s70
      %s71 = sphi 0, %s68
      %s72 = sphi 0, %s71
      %s88 = sphi 0, %s72
    $region4: #{tpu_custom_call.1} parent=1 // loop_header_branch
      %14 = sbr.rel (%p12) target = $region8
    $region5: #{tpu_custom_call.1} parent=1 // loop_body
      %s16 = ssub.s32 %s11, 1
      %s17 = ssub.s32 %s11, 2
      %s18 = sadd.s32 %s11, 1
      %s19 = ssub.s32 %s11, %s18
      %p20 = scmp.eq.s32.totalorder %s19, 0
      %s22 = sadd.s32 %s21, 1
      %s23 = scalar_select %p20, %s21, %s22
      %p26 = pneg %p20
      %p27 = scmp.eq.s32.totalorder %s11, 1
      %p28 = por %p26, %p27
      %p29 = scmp.ne.s32.totalorder %s21, %s24
      %p30 = scmp.eq.s32.totalorder %s11, 0
      %p31 = por %p29, %p30
      %p32 = scmp.ne.s32.totalorder %s21, %s24
      %p33 = scmp.eq.s32.totalorder %s16, 1
      %p34 = por %p32, %p33
      %p35 = scmp.ne.s32.totalorder %s24, %s25
      %p36 = scmp.eq.s32.totalorder %s16, 0
      %p37 = por %p35, %p36
      %p38 = scmp.ne.s32.totalorder %s24, %s25
      %p39 = scmp.eq.s32.totalorder %s17, 1
      %p40 = por %p38, %p39
      %p42 = scmp.ne.s32.totalorder %s25, %s41
      %p43 = scmp.eq.s32.totalorder %s17, 0
      %p44 = por %p42, %p43
      %s46 = sadd.s32 %s45, 1
      %p49 = scmp.eq.s32.totalorder %s11, 1
      %p50 = scmp.ne.s32.totalorder %s45, %s47
      %p51 = scmp.eq.s32.totalorder %s11, 0
      %p52 = por %p50, %p51
      %p53 = scmp.ne.s32.totalorder %s45, %s47
      %p54 = scmp.eq.s32.totalorder %s16, 1
      %p55 = por %p53, %p54
      %p56 = scmp.ne.s32.totalorder %s47, %s48
      %p57 = scmp.eq.s32.totalorder %s16, 0
      %p58 = por %p56, %p57
      %p59 = scmp.ne.s32.totalorder %s47, %s48
      %p60 = scmp.eq.s32.totalorder %s17, 1
      %p61 = por %p59, %p60
      %p63 = scmp.ne.s32.totalorder %s48, %s62
      %p64 = scmp.eq.s32.totalorder %s17, 0
      %p65 = por %p63, %p64
      %s66 = ssub.s32 %s11, %s18
      %p67 = scmp.eq.s32.totalorder %s66, 0
      %s69 = sadd.s32 %s68, 1
      %s70 = scalar_select %p67, %s68, %s69
      %p73 = pneg %p67
      %p74 = scmp.eq.s32.totalorder %s11, 1
      %p75 = por %p73, %p74
      %p76 = scmp.ne.s32.totalorder %s68, %s71
      %p77 = scmp.eq.s32.totalorder %s11, 0
      %p78 = por %p76, %p77
      %p79 = scmp.ne.s32.totalorder %s68, %s71
      %p80 = scmp.eq.s32.totalorder %s16, 1
      %p81 = por %p79, %p80
      %p82 = scmp.ne.s32.totalorder %s71, %s72
      %p83 = scmp.eq.s32.totalorder %s16, 0
      %p84 = por %p82, %p83
      %p85 = scmp.ne.s32.totalorder %s71, %s72
      %p86 = scmp.eq.s32.totalorder %s17, 1
      %p87 = por %p85, %p86
      %p89 = scmp.ne.s32.totalorder %s72, %s88
      %p90 = scmp.eq.s32.totalorder %s17, 0
      %p91 = por %p89, %p90
      %p92 = scmp.le.s32.totalorder 1, %s11
      %p93 = scmp.lt.s32.totalorder %s11, 3
      %p94 = pnand %p92, %p93
      %p95 = pneg %p94
      // Predicated region
      $region9: #{tpu_custom_call.1} parent=5 // pred_check
        _
      $region10: #{tpu_custom_call.1} parent=5 // pred_check_branch
        %97 = sbr.rel (%p94) target = $region12
      $region11: #{tpu_custom_call.1} parent=5 // pred_region
        %s98 = ssub.s32 %s11, 1
        // Predicated region
        $region13: #{tpu_custom_call.1} parent=11 // pred_check
          %p99 = pneg %p58
        $region14: #{tpu_custom_call.1} parent=11 // pred_check_branch
          %101 = sbr.rel (%p99) target = $region16
        $region15: #{tpu_custom_call.1} parent=11 // pred_region
          _
        $region16: #{tpu_custom_call.1} parent=11 // pred_fallthru
          _
      $region12: #{tpu_custom_call.1} parent=5 // pred_fallthru
        _
      %p102 = scmp.lt.s32.totalorder %s11, 2
      // Predicated region
      $region17: #{tpu_custom_call.1} parent=5 // pred_check
        %p103 = pneg %p102
      $region18: #{tpu_custom_call.1} parent=5 // pred_check_branch
        %105 = sbr.rel (%p103) target = $region20
      $region19: #{tpu_custom_call.1} parent=5 // pred_region
        // Predicated region
        $region21: #{tpu_custom_call.1} parent=19 // pred_check
          %p106 = pneg %p31
        $region22: #{tpu_custom_call.1} parent=19 // pred_check_branch
          %108 = sbr.rel (%p106) target = $region24
        $region23: #{tpu_custom_call.1} parent=19 // pred_region
          %p109 = scmp.lt.s32.totalorder %s11, 1
          %s110 = scalar_select %p109, %s11, 1
          %s111 = smul.addr %s110, 54
          %s112 = smul.addr %s111, 4
          %s113 = scalar_lea.vmem %s0, %s112
        $region24: #{tpu_custom_call.1} parent=19 // pred_fallthru
          _
      $region20: #{tpu_custom_call.1} parent=5 // pred_fallthru
        _
      %p114 = scmp.le.s32.totalorder 1, %s11
      %p115 = scmp.lt.s32.totalorder %s11, 3
      %p116 = pnand %p114, %p115
      %p117 = pneg %p116
      // Predicated region
      $region25: #{tpu_custom_call.1} parent=5 // pred_check
        _
      $region26: #{tpu_custom_call.1} parent=5 // pred_check_branch
        %119 = sbr.rel (%p116) target = $region28
      $region27: #{tpu_custom_call.1} parent=5 // pred_region
        %s120 = ssub.s32 %s11, 1
        %p121 = scmp.lt.s32.totalorder %s16, 1
        %s122 = scalar_select %p121, %s16, 1
        %s123 = smul.addr %s122, 54
        %s124 = smul.addr %s123, 4
        %s125 = scalar_lea.vmem %s0, %s124
        %p126 = pneg %p37
        %p127 = pneg %p34
        %p128 = pneg %p58
        %p129 = pneg %p55
        %p130 = pneg %p84
        %p131 = pneg %p81
        %s132 = sand.u32 %s71, 1
        %s133 = scalar_lea.sflag [#allocation3], %s132
        %s134 = sand.u32 %s71, 1
        %s135 = smul.addr %s134, 2
        %s136 = scalar_lea.vmem [#allocation2], %s135
        %p137 = scmp.lt.s32.totalorder %s16, 1
        %s138 = scalar_select %p137, %s16, 1
        %s139 = smul.addr %s138, 54
        %s140 = smul.addr %s139, 4
        %s141 = scalar_lea.vmem %s0, %s140
        %v143 = vld [vmem:[%s141] sm:$0xf]
        %v144 = vld [vmem:[%s141 + $0x4] sm:$0xf]
        %v145 = vld [vmem:[%s141 + $0x8] sm:$0x1]
        %v146 = vld [vmem:[%s141 + $0xc] sm:$0xf]
        %v147 = vld [vmem:[%s141 + $0x10] sm:$0xf]
        %v148 = vld [vmem:[%s141 + $0x14] sm:$0x1]
        %v149 = vld [vmem:[%s141 + $0x18] sm:$0xf]
        %v150 = vld [vmem:[%s141 + $0x1c] sm:$0xf]
        %v151 = vld [vmem:[%s141 + $0x20] sm:$0x1]
        %v152 = vld [vmem:[%s141 + $0x24] sm:$0xf]
        %v153 = vld [vmem:[%s141 + $0x28] sm:$0xf]
        %v154 = vld [vmem:[%s141 + $0x2c] sm:$0x1]
        %v155 = vld [vmem:[%s141 + $0x30] sm:$0xf]
        %v156 = vld [vmem:[%s141 + $0x34] sm:$0xf]
        %v157 = vld [vmem:[%s141 + $0x38] sm:$0x1]
        %v158 = vld [vmem:[%s141 + $0x3c] sm:$0xf]
        %v159 = vld [vmem:[%s141 + $0x40] sm:$0xf]
        %v160 = vld [vmem:[%s141 + $0x44] sm:$0x1]
        %v161 = vld [vmem:[%s141 + $0x48] sm:$0xf]
        %v162 = vld [vmem:[%s141 + $0x4c] sm:$0xf]
        %v163 = vld [vmem:[%s141 + $0x50] sm:$0x1]
        %v164 = vld [vmem:[%s141 + $0x54] sm:$0xf]
        %v165 = vld [vmem:[%s141 + $0x58] sm:$0xf]
        %v166 = vld [vmem:[%s141 + $0x5c] sm:$0x1]
        %v167 = vld [vmem:[%s141 + $0x60] sm:$0xf]
        %v168 = vld [vmem:[%s141 + $0x64] sm:$0xf]
        %v169 = vld [vmem:[%s141 + $0x68] sm:$0x1]
        %v170 = vld [vmem:[%s141 + $0x6c] sm:$0xf]
        %v171 = vld [vmem:[%s141 + $0x70] sm:$0xf]
        %v172 = vld [vmem:[%s141 + $0x74] sm:$0x1]
        %v173 = vld [vmem:[%s141 + $0x78] sm:$0xf]
        %v174 = vld [vmem:[%s141 + $0x7c] sm:$0xf]
        %v175 = vld [vmem:[%s141 + $0x80] sm:$0x1]
        %v176 = vld [vmem:[%s141 + $0x84] sm:$0xf]
        %v177 = vld [vmem:[%s141 + $0x88] sm:$0xf]
        %v178 = vld [vmem:[%s141 + $0x8c] sm:$0x1]
        %v179 = vld [vmem:[%s141 + $0x90] sm:$0xf]
        %v180 = vld [vmem:[%s141 + $0x94] sm:$0xf]
        %v181 = vld [vmem:[%s141 + $0x98] sm:$0x1]
        %v182 = vld [vmem:[%s141 + $0x9c] sm:$0xf]
        %v183 = vld [vmem:[%s141 + $0xa0] sm:$0xf]
        %v184 = vld [vmem:[%s141 + $0xa4] sm:$0x1]
        %v185 = vld [vmem:[%s141 + $0xa8] sm:$0xf]
        %v186 = vld [vmem:[%s141 + $0xac] sm:$0xf]
        %v187 = vld [vmem:[%s141 + $0xb0] sm:$0x1]
        %v188 = vld [vmem:[%s141 + $0xb4] sm:$0xf]
        %v189 = vld [vmem:[%s141 + $0xb8] sm:$0xf]
        %v190 = vld [vmem:[%s141 + $0xbc] sm:$0x1]
        %v191 = vld [vmem:[%s141 + $0xc0] sm:$0xf]
        %v192 = vld [vmem:[%s141 + $0xc4] sm:$0xf]
        %v193 = vld [vmem:[%s141 + $0xc8] sm:$0x1]
        %v194 = vld [vmem:[%s141 + $0xcc] sm:$0xf]
        %v195 = vld [vmem:[%s141 + $0xd0] sm:$0xf]
        %v196 = vld [vmem:[%s141 + $0xd4] sm:$0x1]
        %v197 = vld [vmem:[%s1] sm:$0xf]
        %vm198 = vsmask.f32 3328
        %vm199 = vsmask.f32 7440
        %vm200 = vmor %vm198, %vm199
        %v202 = vshrl.u32 %v143, 16
        %v204 = vrot.slane %v202, 4
        %v205 = vshll.u32 %v143, 16
        %v207 = vrot.slane %v205, 5
        %v208 = vor.u32 %v204, %v207
        %v209 = vrot.slane %v208, 4
        %v211 = vshll.u32 %v144, 16
        %v213 = vrot.slane %v211, 5
        %v214 = vsel %vm200, %v209, %v213
        %v215 = vshrl.u32 %v144, 16
        %v217 = vrot.slane %v215, 4
        %v218 = vor.u32 %v217, %v213
        %v219 = vrot.slane %v218, 4
        %v221 = vshll.u32 %v145, 16
        %v223 = vrot.slane %v221, 5
        %v224 = vsel %vm200, %v219, %v223
        %v226 = vshrl.u32 %v146, 16
        %v228 = vrot.slane %v226, 4
        %v229 = vshll.u32 %v146, 16
        %v231 = vrot.slane %v229, 5
        %v232 = vor.u32 %v228, %v231
        %v233 = vrot.slane %v232, 4
        %v235 = vshll.u32 %v147, 16
        %v237 = vrot.slane %v235, 5
        %v238 = vsel %vm200, %v233, %v237
        %v239 = vshrl.u32 %v147, 16
        %v241 = vrot.slane %v239, 4
        %v242 = vor.u32 %v241, %v237
        %v243 = vrot.slane %v242, 4
        %v245 = vshll.u32 %v148, 16
        %v247 = vrot.slane %v245, 5
        %v248 = vsel %vm200, %v243, %v247
        %v250 = vshrl.u32 %v149, 16
        %v252 = vrot.slane %v250, 4
        %v253 = vshll.u32 %v149, 16
        %v255 = vrot.slane %v253, 5
        %v256 = vor.u32 %v252, %v255
        %v257 = vrot.slane %v256, 4
        %v259 = vshll.u32 %v150, 16
        %v261 = vrot.slane %v259, 5
        %v262 = vsel %vm200, %v257, %v261
        %v263 = vshrl.u32 %v150, 16
        %v265 = vrot.slane %v263, 4
        %v266 = vor.u32 %v265, %v261
        %v267 = vrot.slane %v266, 4
        %v269 = vshll.u32 %v151, 16
        %v271 = vrot.slane %v269, 5
        %v272 = vsel %vm200, %v267, %v271
        %v274 = vshrl.u32 %v152, 16
        %v276 = vrot.slane %v274, 4
        %v277 = vshll.u32 %v152, 16
        %v279 = vrot.slane %v277, 5
        %v280 = vor.u32 %v276, %v279
        %v281 = vrot.slane %v280, 4
        %v283 = vshll.u32 %v153, 16
        %v285 = vrot.slane %v283, 5
        %v286 = vsel %vm200, %v281, %v285
        %v287 = vshrl.u32 %v153, 16
        %v289 = vrot.slane %v287, 4
        %v290 = vor.u32 %v289, %v285
        %v291 = vrot.slane %v290, 4
        %v293 = vshll.u32 %v154, 16
        %v295 = vrot.slane %v293, 5
        %v296 = vsel %vm200, %v291, %v295
        %v298 = vshrl.u32 %v155, 16
        %v300 = vrot.slane %v298, 4
        %v301 = vshll.u32 %v155, 16
        %v303 = vrot.slane %v301, 5
        %v304 = vor.u32 %v300, %v303
        %v305 = vrot.slane %v304, 4
        %v307 = vshll.u32 %v156, 16
        %v309 = vrot.slane %v307, 5
        %v310 = vsel %vm200, %v305, %v309
        %v311 = vshrl.u32 %v156, 16
        %v313 = vrot.slane %v311, 4
        %v314 = vor.u32 %v313, %v309
        %v315 = vrot.slane %v314, 4
        %v317 = vshll.u32 %v157, 16
        %v319 = vrot.slane %v317, 5
        %v320 = vsel %vm200, %v315, %v319
        %v322 = vshrl.u32 %v158, 16
        %v324 = vrot.slane %v322, 4
        %v325 = vshll.u32 %v158, 16
        %v327 = vrot.slane %v325, 5
        %v328 = vor.u32 %v324, %v327
        %v329 = vrot.slane %v328, 4
        %v331 = vshll.u32 %v159, 16
        %v333 = vrot.slane %v331, 5
        %v334 = vsel %vm200, %v329, %v333
        %v335 = vshrl.u32 %v159, 16
        %v337 = vrot.slane %v335, 4
        %v338 = vor.u32 %v337, %v333
        %v339 = vrot.slane %v338, 4
        %v341 = vshll.u32 %v160, 16
        %v343 = vrot.slane %v341, 5
        %v344 = vsel %vm200, %v339, %v343
        %v346 = vshrl.u32 %v161, 16
        %v348 = vrot.slane %v346, 4
        %v349 = vshll.u32 %v161, 16
        %v351 = vrot.slane %v349, 5
        %v352 = vor.u32 %v348, %v351
        %v353 = vrot.slane %v352, 4
        %v355 = vshll.u32 %v162, 16
        %v357 = vrot.slane %v355, 5
        %v358 = vsel %vm200, %v353, %v357
        %v359 = vshrl.u32 %v162, 16
        %v361 = vrot.slane %v359, 4
        %v362 = vor.u32 %v361, %v357
        %v363 = vrot.slane %v362, 4
        %v365 = vshll.u32 %v163, 16
        %v367 = vrot.slane %v365, 5
        %v368 = vsel %vm200, %v363, %v367
        %v370 = vshrl.u32 %v164, 16
        %v372 = vrot.slane %v370, 4
        %v373 = vshll.u32 %v164, 16
        %v375 = vrot.slane %v373, 5
        %v376 = vor.u32 %v372, %v375
        %v377 = vrot.slane %v376, 4
        %v379 = vshll.u32 %v165, 16
        %v381 = vrot.slane %v379, 5
        %v382 = vsel %vm200, %v377, %v381
        %v383 = vshrl.u32 %v165, 16
        %v385 = vrot.slane %v383, 4
        %v386 = vor.u32 %v385, %v381
        %v387 = vrot.slane %v386, 4
        %v389 = vshll.u32 %v166, 16
        %v391 = vrot.slane %v389, 5
        %v392 = vsel %vm200, %v387, %v391
        %v394 = vshrl.u32 %v167, 16
        %v396 = vrot.slane %v394, 4
        %v397 = vshll.u32 %v167, 16
        %v399 = vrot.slane %v397, 5
        %v400 = vor.u32 %v396, %v399
        %v401 = vrot.slane %v400, 4
        %v403 = vshll.u32 %v168, 16
        %v405 = vrot.slane %v403, 5
        %v406 = vsel %vm200, %v401, %v405
        %v407 = vshrl.u32 %v168, 16
        %v409 = vrot.slane %v407, 4
        %v410 = vor.u32 %v409, %v405
        %v411 = vrot.slane %v410, 4
        %v413 = vshll.u32 %v169, 16
        %v415 = vrot.slane %v413, 5
        %v416 = vsel %vm200, %v411, %v415
        %v418 = vshrl.u32 %v170, 16
        %v420 = vrot.slane %v418, 4
        %v421 = vshll.u32 %v170, 16
        %v423 = vrot.slane %v421, 5
        %v424 = vor.u32 %v420, %v423
        %v425 = vrot.slane %v424, 4
        %v427 = vshll.u32 %v171, 16
        %v429 = vrot.slane %v427, 5
        %v430 = vsel %vm200, %v425, %v429
        %v431 = vshrl.u32 %v171, 16
        %v433 = vrot.slane %v431, 4
        %v434 = vor.u32 %v433, %v429
        %v435 = vrot.slane %v434, 4
        %v437 = vshll.u32 %v172, 16
        %v439 = vrot.slane %v437, 5
        %v440 = vsel %vm200, %v435, %v439
        %v442 = vshrl.u32 %v173, 16
        %v444 = vrot.slane %v442, 4
        %v445 = vshll.u32 %v173, 16
        %v447 = vrot.slane %v445, 5
        %v448 = vor.u32 %v444, %v447
        %v449 = vrot.slane %v448, 4
        %v451 = vshll.u32 %v174, 16
        %v453 = vrot.slane %v451, 5
        %v454 = vsel %vm200, %v449, %v453
        %v455 = vshrl.u32 %v174, 16
        %v457 = vrot.slane %v455, 4
        %v458 = vor.u32 %v457, %v453
        %v459 = vrot.slane %v458, 4
        %v461 = vshll.u32 %v175, 16
        %v463 = vrot.slane %v461, 5
        %v464 = vsel %vm200, %v459, %v463
        %v466 = vshrl.u32 %v176, 16
        %v468 = vrot.slane %v466, 4
        %v469 = vshll.u32 %v176, 16
        %v471 = vrot.slane %v469, 5
        %v472 = vor.u32 %v468, %v471
        %v473 = vrot.slane %v472, 4
        %v475 = vshll.u32 %v177, 16
        %v477 = vrot.slane %v475, 5
        %v478 = vsel %vm200, %v473, %v477
        %v479 = vshrl.u32 %v177, 16
        %v481 = vrot.slane %v479, 4
        %v482 = vor.u32 %v481, %v477
        %v483 = vrot.slane %v482, 4
        %v485 = vshll.u32 %v178, 16
        %v487 = vrot.slane %v485, 5
        %v488 = vsel %vm200, %v483, %v487
        %v490 = vshrl.u32 %v179, 16
        %v492 = vrot.slane %v490, 4
        %v493 = vshll.u32 %v179, 16
        %v495 = vrot.slane %v493, 5
        %v496 = vor.u32 %v492, %v495
        %v497 = vrot.slane %v496, 4
        %v499 = vshll.u32 %v180, 16
        %v501 = vrot.slane %v499, 5
        %v502 = vsel %vm200, %v497, %v501
        %v503 = vshrl.u32 %v180, 16
        %v505 = vrot.slane %v503, 4
        %v506 = vor.u32 %v505, %v501
        %v507 = vrot.slane %v506, 4
        %v509 = vshll.u32 %v181, 16
        %v511 = vrot.slane %v509, 5
        %v512 = vsel %vm200, %v507, %v511
        %v514 = vshrl.u32 %v182, 16
        %v516 = vrot.slane %v514, 4
        %v517 = vshll.u32 %v182, 16
        %v519 = vrot.slane %v517, 5
        %v520 = vor.u32 %v516, %v519
        %v521 = vrot.slane %v520, 4
        %v523 = vshll.u32 %v183, 16
        %v525 = vrot.slane %v523, 5
        %v526 = vsel %vm200, %v521, %v525
        %v527 = vshrl.u32 %v183, 16
        %v529 = vrot.slane %v527, 4
        %v530 = vor.u32 %v529, %v525
        %v531 = vrot.slane %v530, 4
        %v533 = vshll.u32 %v184, 16
        %v535 = vrot.slane %v533, 5
        %v536 = vsel %vm200, %v531, %v535
        %v538 = vshrl.u32 %v185, 16
        %v540 = vrot.slane %v538, 4
        %v541 = vshll.u32 %v185, 16
        %v543 = vrot.slane %v541, 5
        %v544 = vor.u32 %v540, %v543
        %v545 = vrot.slane %v544, 4
        %v547 = vshll.u32 %v186, 16
        %v549 = vrot.slane %v547, 5
        %v550 = vsel %vm200, %v545, %v549
        %v551 = vshrl.u32 %v186, 16
        %v553 = vrot.slane %v551, 4
        %v554 = vor.u32 %v553, %v549
        %v555 = vrot.slane %v554, 4
        %v557 = vshll.u32 %v187, 16
        %v559 = vrot.slane %v557, 5
        %v560 = vsel %vm200, %v555, %v559
        %v562 = vshrl.u32 %v188, 16
        %v564 = vrot.slane %v562, 4
        %v565 = vshll.u32 %v188, 16
        %v567 = vrot.slane %v565, 5
        %v568 = vor.u32 %v564, %v567
        %v569 = vrot.slane %v568, 4
        %v571 = vshll.u32 %v189, 16
        %v573 = vrot.slane %v571, 5
        %v574 = vsel %vm200, %v569, %v573
        %v575 = vshrl.u32 %v189, 16
        %v577 = vrot.slane %v575, 4
        %v578 = vor.u32 %v577, %v573
        %v579 = vrot.slane %v578, 4
        %v581 = vshll.u32 %v190, 16
        %v583 = vrot.slane %v581, 5
        %v584 = vsel %vm200, %v579, %v583
        %s585 = scalar_lea.vmem %s1, 4
        %v586 = vld [vmem:[%s585] sm:$0xf]
        %v587 = vunpack.c.l.b16 %v214
        %v588 = vunpack.c.l.b16 %v224
        %v589 = vunpack.c.l.b16 %v238
        %v590 = vunpack.c.l.b16 %v248
        %v591 = vunpack.c.l.b16 %v262
        %v592 = vunpack.c.l.b16 %v272
        %v593 = vunpack.c.l.b16 %v286
        %v594 = vunpack.c.l.b16 %v296
        %v595 = vunpack.c.l.b16 %v310
        %v596 = vunpack.c.l.b16 %v320
        %v597 = vunpack.c.l.b16 %v334
        %v598 = vunpack.c.l.b16 %v344
        %v599 = vunpack.c.l.b16 %v358
        %v600 = vunpack.c.l.b16 %v368
        %v601 = vunpack.c.l.b16 %v382
        %v602 = vunpack.c.l.b16 %v392
        %v603 = vunpack.c.l.b16 %v406
        %v604 = vunpack.c.l.b16 %v416
        %v605 = vunpack.c.l.b16 %v430
        %v606 = vunpack.c.l.b16 %v440
        %v607 = vunpack.c.l.b16 %v454
        %v608 = vunpack.c.l.b16 %v464
        %v609 = vunpack.c.l.b16 %v478
        %v610 = vunpack.c.l.b16 %v488
        %v611 = vunpack.c.l.b16 %v502
        %v612 = vunpack.c.l.b16 %v512
        %v613 = vunpack.c.l.b16 %v526
        %v614 = vunpack.c.l.b16 %v536
        %v615 = vunpack.c.l.b16 %v550
        %v616 = vunpack.c.l.b16 %v560
        %v617 = vunpack.c.l.b16 %v574
        %v618 = vunpack.c.l.b16 %v584
        %v619 = vpack.c.b16 %v588, %v587
        %v620 = vpack.c.b16 %v590, %v589
        %v621 = vpack.c.b16 %v592, %v591
        %v622 = vpack.c.b16 %v594, %v593
        %v623 = vpack.c.b16 %v596, %v595
        %v624 = vpack.c.b16 %v598, %v597
        %v625 = vpack.c.b16 %v600, %v599
        %v626 = vpack.c.b16 %v602, %v601
        %v627 = vpack.c.b16 %v604, %v603
        %v628 = vpack.c.b16 %v606, %v605
        %v629 = vpack.c.b16 %v608, %v607
        %v630 = vpack.c.b16 %v610, %v609
        %v631 = vpack.c.b16 %v612, %v611
        %v632 = vpack.c.b16 %v614, %v613
        %v633 = vpack.c.b16 %v616, %v615
        %v634 = vpack.c.b16 %v618, %v617
        %vm635 = vcmask 64512
        %v637 = vsel %vm635, %v619, 0
        %v640 = vsel %vm635, %v620, 0
        %v643 = vsel %vm635, %v621, 0
        %v646 = vsel %vm635, %v622, 0
        %v649 = vsel %vm635, %v623, 0
        %v652 = vsel %vm635, %v624, 0
        %v655 = vsel %vm635, %v625, 0
        %v658 = vsel %vm635, %v626, 0
        %v661 = vsel %vm635, %v627, 0
        %v664 = vsel %vm635, %v628, 0
        %v667 = vsel %vm635, %v629, 0
        %v670 = vsel %vm635, %v630, 0
        %v673 = vsel %vm635, %v631, 0
        %v676 = vsel %vm635, %v632, 0
        %v679 = vsel %vm635, %v633, 0
        %v682 = vsel %vm635, %v634, 0
        %vm684 = vcmask 1043456
        %v686 = vsel %vm684, %v586, 0
        %688 = vmatpush.bf16.msra.mxu0 0
        %689 = vmatpush.bf16.msra.mxu0 0
        %690 = vmatpush.bf16.msra.mxu0 0
        %691 = vmatpush.bf16.msra.mxu0 0
        %692 = vmatpush.bf16.msra.mxu0 0
        %693 = vmatpush.bf16.msra.mxu0 0
        %694 = vmatpush.bf16.msra.mxu0 0
        %695 = vmatpush.bf16.msra.mxu0 %v686
        %696 = vmatmul.bf16.gmra.mxu0 %v637
        %v697 = vpop.f32.mrf.mxu0
        %v698 = vadd.f32 0.0, %v697
        %v699 = vpop.f32.mrf.mxu0
        %v700 = vadd.f32 0.0, %v699
        %701 = vmatmul.bf16.gmra.mxu0 %v640
        %v702 = vpop.f32.mrf.mxu0
        %v703 = vadd.f32 0.0, %v702
        %v704 = vpop.f32.mrf.mxu0
        %v705 = vadd.f32 0.0, %v704
        %706 = vmatmul.bf16.gmra.mxu0 %v643
        %v707 = vpop.f32.mrf.mxu0
        %v708 = vadd.f32 0.0, %v707
        %v709 = vpop.f32.mrf.mxu0
        %v710 = vadd.f32 0.0, %v709
        %711 = vmatmul.bf16.gmra.mxu0 %v646
        %v712 = vpop.f32.mrf.mxu0
        %v713 = vadd.f32 0.0, %v712
        %v714 = vpop.f32.mrf.mxu0
        %v715 = vadd.f32 0.0, %v714
        %716 = vmatmul.bf16.gmra.mxu0 %v649
        %v717 = vpop.f32.mrf.mxu0
        %v718 = vadd.f32 0.0, %v717
        %v719 = vpop.f32.mrf.mxu0
        %v720 = vadd.f32 0.0, %v719
        %721 = vmatmul.bf16.gmra.mxu0 %v652
        %v722 = vpop.f32.mrf.mxu0
        %v723 = vadd.f32 0.0, %v722
        %v724 = vpop.f32.mrf.mxu0
        %v725 = vadd.f32 0.0, %v724
        %726 = vmatmul.bf16.gmra.mxu0 %v655
        %v727 = vpop.f32.mrf.mxu0
        %v728 = vadd.f32 0.0, %v727
        %v729 = vpop.f32.mrf.mxu0
        %v730 = vadd.f32 0.0, %v729
        %731 = vmatmul.bf16.gmra.mxu0 %v658
        %v732 = vpop.f32.mrf.mxu0
        %v733 = vadd.f32 0.0, %v732
        %v734 = vpop.f32.mrf.mxu0
        %v735 = vadd.f32 0.0, %v734
        %736 = vmatmul.bf16.gmra.mxu0 %v661
        %v737 = vpop.f32.mrf.mxu0
        %v738 = vadd.f32 0.0, %v737
        %v739 = vpop.f32.mrf.mxu0
        %v740 = vadd.f32 0.0, %v739
        %741 = vmatmul.bf16.gmra.mxu0 %v664
        %v742 = vpop.f32.mrf.mxu0
        %v743 = vadd.f32 0.0, %v742
        %v744 = vpop.f32.mrf.mxu0
        %v745 = vadd.f32 0.0, %v744
        %746 = vmatmul.bf16.gmra.mxu0 %v667
        %v747 = vpop.f32.mrf.mxu0
        %v748 = vadd.f32 0.0, %v747
        %v749 = vpop.f32.mrf.mxu0
        %v750 = vadd.f32 0.0, %v749
        %751 = vmatmul.bf16.gmra.mxu0 %v670
        %v752 = vpop.f32.mrf.mxu0
        %v753 = vadd.f32 0.0, %v752
        %v754 = vpop.f32.mrf.mxu0
        %v755 = vadd.f32 0.0, %v754
        %756 = vmatmul.bf16.gmra.mxu0 %v673
        %v757 = vpop.f32.mrf.mxu0
        %v758 = vadd.f32 0.0, %v757
        %v759 = vpop.f32.mrf.mxu0
        %v760 = vadd.f32 0.0, %v759
        %761 = vmatmul.bf16.gmra.mxu0 %v676
        %v762 = vpop.f32.mrf.mxu0
        %v763 = vadd.f32 0.0, %v762
        %v764 = vpop.f32.mrf.mxu0
        %v765 = vadd.f32 0.0, %v764
        %766 = vmatmul.bf16.gmra.mxu0 %v679
        %v767 = vpop.f32.mrf.mxu0
        %v768 = vadd.f32 0.0, %v767
        %v769 = vpop.f32.mrf.mxu0
        %v770 = vadd.f32 0.0, %v769
        %771 = vmatmul.bf16.gmra.mxu0 %v682
        %v772 = vpop.f32.mrf.mxu0
        %v773 = vadd.f32 0.0, %v772
        %v774 = vpop.f32.mrf.mxu0
        %v775 = vadd.f32 0.0, %v774
        %776 = vdwg.mxu0
        %v809 = vunpack.c.l.b16 %v143
        %v810 = vunpack.c.l.b16 %v144
        %v811 = vunpack.c.l.b16 %v146
        %v812 = vunpack.c.l.b16 %v147
        %v813 = vunpack.c.l.b16 %v149
        %v814 = vunpack.c.l.b16 %v150
        %v815 = vunpack.c.l.b16 %v152
        %v816 = vunpack.c.l.b16 %v153
        %v817 = vunpack.c.l.b16 %v155
        %v818 = vunpack.c.l.b16 %v156
        %v819 = vunpack.c.l.b16 %v158
        %v820 = vunpack.c.l.b16 %v159
        %v821 = vunpack.c.l.b16 %v161
        %v822 = vunpack.c.l.b16 %v162
        %v823 = vunpack.c.l.b16 %v164
        %v824 = vunpack.c.l.b16 %v165
        %v825 = vunpack.c.l.b16 %v167
        %v826 = vunpack.c.l.b16 %v168
        %v827 = vunpack.c.l.b16 %v170
        %v828 = vunpack.c.l.b16 %v171
        %v829 = vunpack.c.l.b16 %v173
        %v830 = vunpack.c.l.b16 %v174
        %v831 = vunpack.c.l.b16 %v176
        %v832 = vunpack.c.l.b16 %v177
        %v833 = vunpack.c.l.b16 %v179
        %v834 = vunpack.c.l.b16 %v180
        %v835 = vunpack.c.l.b16 %v182
        %v836 = vunpack.c.l.b16 %v183
        %v837 = vunpack.c.l.b16 %v185
        %v838 = vunpack.c.l.b16 %v186
        %v839 = vunpack.c.l.b16 %v188
        %v840 = vunpack.c.l.b16 %v189
        %v841 = vpack.c.b16 %v810, %v809
        %v842 = vpack.c.b16 %v812, %v811
        %v843 = vpack.c.b16 %v814, %v813
        %v844 = vpack.c.b16 %v816, %v815
        %v845 = vpack.c.b16 %v818, %v817
        %v846 = vpack.c.b16 %v820, %v819
        %v847 = vpack.c.b16 %v822, %v821
        %v848 = vpack.c.b16 %v824, %v823
        %v849 = vpack.c.b16 %v826, %v825
        %v850 = vpack.c.b16 %v828, %v827
        %v851 = vpack.c.b16 %v830, %v829
        %v852 = vpack.c.b16 %v832, %v831
        %v853 = vpack.c.b16 %v834, %v833
        %v854 = vpack.c.b16 %v836, %v835
        %v855 = vpack.c.b16 %v838, %v837
        %v856 = vpack.c.b16 %v840, %v839
        %v858 = vsel %vm635, %v841, 0
        %v861 = vsel %vm635, %v842, 0
        %v864 = vsel %vm635, %v843, 0
        %v867 = vsel %vm635, %v844, 0
        %v870 = vsel %vm635, %v845, 0
        %v873 = vsel %vm635, %v846, 0
        %v876 = vsel %vm635, %v847, 0
        %v879 = vsel %vm635, %v848, 0
        %v882 = vsel %vm635, %v849, 0
        %v885 = vsel %vm635, %v850, 0
        %v888 = vsel %vm635, %v851, 0
        %v891 = vsel %vm635, %v852, 0
        %v894 = vsel %vm635, %v853, 0
        %v897 = vsel %vm635, %v854, 0
        %v900 = vsel %vm635, %v855, 0
        %v903 = vsel %vm635, %v856, 0
        %v906 = vsel %vm684, %v197, 0
        %908 = vmatpush.bf16.msra.mxu0 0
        %909 = vmatpush.bf16.msra.mxu0 0
        %910 = vmatpush.bf16.msra.mxu0 0
        %911 = vmatpush.bf16.msra.mxu0 0
        %912 = vmatpush.bf16.msra.mxu0 0
        %913 = vmatpush.bf16.msra.mxu0 0
        %914 = vmatpush.bf16.msra.mxu0 0
        %915 = vmatpush.bf16.msra.mxu0 %v906
        %916 = vmatmul.bf16.gmra.mxu0 %v858
        %v917 = vpop.f32.mrf.mxu0
        %v918 = vadd.f32 %v698, %v917
        %v919 = vpop.f32.mrf.mxu0
        %v920 = vadd.f32 %v700, %v919
        %921 = vmatmul.bf16.gmra.mxu0 %v861
        %v922 = vpop.f32.mrf.mxu0
        %v923 = vadd.f32 %v703, %v922
        %v924 = vpop.f32.mrf.mxu0
        %v925 = vadd.f32 %v705, %v924
        %926 = vmatmul.bf16.gmra.mxu0 %v864
        %v927 = vpop.f32.mrf.mxu0
        %v928 = vadd.f32 %v708, %v927
        %v929 = vpop.f32.mrf.mxu0
        %v930 = vadd.f32 %v710, %v929
        %931 = vmatmul.bf16.gmra.mxu0 %v867
        %v932 = vpop.f32.mrf.mxu0
        %v933 = vadd.f32 %v713, %v932
        %v934 = vpop.f32.mrf.mxu0
        %v935 = vadd.f32 %v715, %v934
        %936 = vmatmul.bf16.gmra.mxu0 %v870
        %v937 = vpop.f32.mrf.mxu0
        %v938 = vadd.f32 %v718, %v937
        %v939 = vpop.f32.mrf.mxu0
        %v940 = vadd.f32 %v720, %v939
        %941 = vmatmul.bf16.gmra.mxu0 %v873
        %v942 = vpop.f32.mrf.mxu0
        %v943 = vadd.f32 %v723, %v942
        %v944 = vpop.f32.mrf.mxu0
        %v945 = vadd.f32 %v725, %v944
        %946 = vmatmul.bf16.gmra.mxu0 %v876
        %v947 = vpop.f32.mrf.mxu0
        %v948 = vadd.f32 %v728, %v947
        %v949 = vpop.f32.mrf.mxu0
        %v950 = vadd.f32 %v730, %v949
        %951 = vmatmul.bf16.gmra.mxu0 %v879
        %v952 = vpop.f32.mrf.mxu0
        %v953 = vadd.f32 %v733, %v952
        %v954 = vpop.f32.mrf.mxu0
        %v955 = vadd.f32 %v735, %v954
        %956 = vmatmul.bf16.gmra.mxu0 %v882
        %v957 = vpop.f32.mrf.mxu0
        %v958 = vadd.f32 %v738, %v957
        %v959 = vpop.f32.mrf.mxu0
        %v960 = vadd.f32 %v740, %v959
        %961 = vmatmul.bf16.gmra.mxu0 %v885
        %v962 = vpop.f32.mrf.mxu0
        %v963 = vadd.f32 %v743, %v962
        %v964 = vpop.f32.mrf.mxu0
        %v965 = vadd.f32 %v745, %v964
        %966 = vmatmul.bf16.gmra.mxu0 %v888
        %v967 = vpop.f32.mrf.mxu0
        %v968 = vadd.f32 %v748, %v967
        %v969 = vpop.f32.mrf.mxu0
        %v970 = vadd.f32 %v750, %v969
        %971 = vmatmul.bf16.gmra.mxu0 %v891
        %v972 = vpop.f32.mrf.mxu0
        %v973 = vadd.f32 %v753, %v972
        %v974 = vpop.f32.mrf.mxu0
        %v975 = vadd.f32 %v755, %v974
        %976 = vmatmul.bf16.gmra.mxu0 %v894
        %v977 = vpop.f32.mrf.mxu0
        %v978 = vadd.f32 %v758, %v977
        %v979 = vpop.f32.mrf.mxu0
        %v980 = vadd.f32 %v760, %v979
        %981 = vmatmul.bf16.gmra.mxu0 %v897
        %v982 = vpop.f32.mrf.mxu0
        %v983 = vadd.f32 %v763, %v982
        %v984 = vpop.f32.mrf.mxu0
        %v985 = vadd.f32 %v765, %v984
        %986 = vmatmul.bf16.gmra.mxu0 %v900
        %v987 = vpop.f32.mrf.mxu0
        %v988 = vadd.f32 %v768, %v987
        %v989 = vpop.f32.mrf.mxu0
        %v990 = vadd.f32 %v770, %v989
        %991 = vmatmul.bf16.gmra.mxu0 %v903
        %v992 = vpop.f32.mrf.mxu0
        %v993 = vadd.f32 %v773, %v992
        %v994 = vpop.f32.mrf.mxu0
        %v995 = vadd.f32 %v775, %v994
        %996 = vdwg.mxu0
        %vm1013 = vcmask 1042432
        %vm1014 = vcmask 1046532
        %vm1015 = vmor %vm1013, %vm1014
        %v1016 = vrot.slane %v143, 5
        %v1017 = vrot.slane %v1016, 4
        %v1018 = vrot.slane %v144, 5
        %v1019 = vsel %vm1015, %v1017, %v1018
        %v1020 = vrot.slane %v1018, 4
        %v1021 = vrot.slane %v145, 5
        %v1022 = vsel %vm1015, %v1020, %v1021
        %v1023 = vrot.slane %v146, 5
        %v1024 = vrot.slane %v1023, 4
        %v1025 = vrot.slane %v147, 5
        %v1026 = vsel %vm1015, %v1024, %v1025
        %v1027 = vrot.slane %v1025, 4
        %v1028 = vrot.slane %v148, 5
        %v1029 = vsel %vm1015, %v1027, %v1028
        %v1030 = vrot.slane %v149, 5
        %v1031 = vrot.slane %v1030, 4
        %v1032 = vrot.slane %v150, 5
        %v1033 = vsel %vm1015, %v1031, %v1032
        %v1034 = vrot.slane %v1032, 4
        %v1035 = vrot.slane %v151, 5
        %v1036 = vsel %vm1015, %v1034, %v1035
        %v1037 = vrot.slane %v152, 5
        %v1038 = vrot.slane %v1037, 4
        %v1039 = vrot.slane %v153, 5
        %v1040 = vsel %vm1015, %v1038, %v1039
        %v1041 = vrot.slane %v1039, 4
        %v1042 = vrot.slane %v154, 5
        %v1043 = vsel %vm1015, %v1041, %v1042
        %v1044 = vrot.slane %v155, 5
        %v1045 = vrot.slane %v1044, 4
        %v1046 = vrot.slane %v156, 5
        %v1047 = vsel %vm1015, %v1045, %v1046
        %v1048 = vrot.slane %v1046, 4
        %v1049 = vrot.slane %v157, 5
        %v1050 = vsel %vm1015, %v1048, %v1049
        %v1051 = vrot.slane %v158, 5
        %v1052 = vrot.slane %v1051, 4
        %v1053 = vrot.slane %v159, 5
        %v1054 = vsel %vm1015, %v1052, %v1053
        %v1055 = vrot.slane %v1053, 4
        %v1056 = vrot.slane %v160, 5
        %v1057 = vsel %vm1015, %v1055, %v1056
        %v1058 = vrot.slane %v161, 5
        %v1059 = vrot.slane %v1058, 4
        %v1060 = vrot.slane %v162, 5
        %v1061 = vsel %vm1015, %v1059, %v1060
        %v1062 = vrot.slane %v1060, 4
        %v1063 = vrot.slane %v163, 5
        %v1064 = vsel %vm1015, %v1062, %v1063
        %v1065 = vrot.slane %v164, 5
        %v1066 = vrot.slane %v1065, 4
        %v1067 = vrot.slane %v165, 5
        %v1068 = vsel %vm1015, %v1066, %v1067
        %v1069 = vrot.slane %v1067, 4
        %v1070 = vrot.slane %v166, 5
        %v1071 = vsel %vm1015, %v1069, %v1070
        %v1072 = vrot.slane %v167, 5
        %v1073 = vrot.slane %v1072, 4
        %v1074 = vrot.slane %v168, 5
        %v1075 = vsel %vm1015, %v1073, %v1074
        %v1076 = vrot.slane %v1074, 4
        %v1077 = vrot.slane %v169, 5
        %v1078 = vsel %vm1015, %v1076, %v1077
        %v1079 = vrot.slane %v170, 5
        %v1080 = vrot.slane %v1079, 4
        %v1081 = vrot.slane %v171, 5
        %v1082 = vsel %vm1015, %v1080, %v1081
        %v1083 = vrot.slane %v1081, 4
        %v1084 = vrot.slane %v172, 5
        %v1085 = vsel %vm1015, %v1083, %v1084
        %v1086 = vrot.slane %v173, 5
        %v1087 = vrot.slane %v1086, 4
        %v1088 = vrot.slane %v174, 5
        %v1089 = vsel %vm1015, %v1087, %v1088
        %v1090 = vrot.slane %v1088, 4
        %v1091 = vrot.slane %v175, 5
        %v1092 = vsel %vm1015, %v1090, %v1091
        %v1093 = vrot.slane %v176, 5
        %v1094 = vrot.slane %v1093, 4
        %v1095 = vrot.slane %v177, 5
        %v1096 = vsel %vm1015, %v1094, %v1095
        %v1097 = vrot.slane %v1095, 4
        %v1098 = vrot.slane %v178, 5
        %v1099 = vsel %vm1015, %v1097, %v1098
        %v1100 = vrot.slane %v179, 5
        %v1101 = vrot.slane %v1100, 4
        %v1102 = vrot.slane %v180, 5
        %v1103 = vsel %vm1015, %v1101, %v1102
        %v1104 = vrot.slane %v1102, 4
        %v1105 = vrot.slane %v181, 5
        %v1106 = vsel %vm1015, %v1104, %v1105
        %v1107 = vrot.slane %v182, 5
        %v1108 = vrot.slane %v1107, 4
        %v1109 = vrot.slane %v183, 5
        %v1110 = vsel %vm1015, %v1108, %v1109
        %v1111 = vrot.slane %v1109, 4
        %v1112 = vrot.slane %v184, 5
        %v1113 = vsel %vm1015, %v1111, %v1112
        %v1114 = vrot.slane %v185, 5
        %v1115 = vrot.slane %v1114, 4
        %v1116 = vrot.slane %v186, 5
        %v1117 = vsel %vm1015, %v1115, %v1116
        %v1118 = vrot.slane %v1116, 4
        %v1119 = vrot.slane %v187, 5
        %v1120 = vsel %vm1015, %v1118, %v1119
        %v1121 = vrot.slane %v188, 5
        %v1122 = vrot.slane %v1121, 4
        %v1123 = vrot.slane %v189, 5
        %v1124 = vsel %vm1015, %v1122, %v1123
        %v1125 = vrot.slane %v1123, 4
        %v1126 = vrot.slane %v190, 5
        %v1127 = vsel %vm1015, %v1125, %v1126
        %s1128 = scalar_lea.vmem %s1, 8
        %v1129 = vld [vmem:[%s1128] sm:$0xf]
        %v1130 = vunpack.c.l.b16 %v1019
        %v1131 = vunpack.c.l.b16 %v1022
        %v1132 = vunpack.c.l.b16 %v1026
        %v1133 = vunpack.c.l.b16 %v1029
        %v1134 = vunpack.c.l.b16 %v1033
        %v1135 = vunpack.c.l.b16 %v1036
        %v1136 = vunpack.c.l.b16 %v1040
        %v1137 = vunpack.c.l.b16 %v1043
        %v1138 = vunpack.c.l.b16 %v1047
        %v1139 = vunpack.c.l.b16 %v1050
        %v1140 = vunpack.c.l.b16 %v1054
        %v1141 = vunpack.c.l.b16 %v1057
        %v1142 = vunpack.c.l.b16 %v1061
        %v1143 = vunpack.c.l.b16 %v1064
        %v1144 = vunpack.c.l.b16 %v1068
        %v1145 = vunpack.c.l.b16 %v1071
        %v1146 = vunpack.c.l.b16 %v1075
        %v1147 = vunpack.c.l.b16 %v1078
        %v1148 = vunpack.c.l.b16 %v1082
        %v1149 = vunpack.c.l.b16 %v1085
        %v1150 = vunpack.c.l.b16 %v1089
        %v1151 = vunpack.c.l.b16 %v1092
        %v1152 = vunpack.c.l.b16 %v1096
        %v1153 = vunpack.c.l.b16 %v1099
        %v1154 = vunpack.c.l.b16 %v1103
        %v1155 = vunpack.c.l.b16 %v1106
        %v1156 = vunpack.c.l.b16 %v1110
        %v1157 = vunpack.c.l.b16 %v1113
        %v1158 = vunpack.c.l.b16 %v1117
        %v1159 = vunpack.c.l.b16 %v1120
        %v1160 = vunpack.c.l.b16 %v1124
        %v1161 = vunpack.c.l.b16 %v1127
        %v1162 = vpack.c.b16 %v1131, %v1130
        %v1163 = vpack.c.b16 %v1133, %v1132
        %v1164 = vpack.c.b16 %v1135, %v1134
        %v1165 = vpack.c.b16 %v1137, %v1136
        %v1166 = vpack.c.b16 %v1139, %v1138
        %v1167 = vpack.c.b16 %v1141, %v1140
        %v1168 = vpack.c.b16 %v1143, %v1142
        %v1169 = vpack.c.b16 %v1145, %v1144
        %v1170 = vpack.c.b16 %v1147, %v1146
        %v1171 = vpack.c.b16 %v1149, %v1148
        %v1172 = vpack.c.b16 %v1151, %v1150
        %v1173 = vpack.c.b16 %v1153, %v1152
        %v1174 = vpack.c.b16 %v1155, %v1154
        %v1175 = vpack.c.b16 %v1157, %v1156
        %v1176 = vpack.c.b16 %v1159, %v1158
        %v1177 = vpack.c.b16 %v1161, %v1160
        %v1179 = vsel %vm635, %v1162, 0
        %v1182 = vsel %vm635, %v1163, 0
        %v1185 = vsel %vm635, %v1164, 0
        %v1188 = vsel %vm635, %v1165, 0
        %v1191 = vsel %vm635, %v1166, 0
        %v1194 = vsel %vm635, %v1167, 0
        %v1197 = vsel %vm635, %v1168, 0
        %v1200 = vsel %vm635, %v1169, 0
        %v1203 = vsel %vm635, %v1170, 0
        %v1206 = vsel %vm635, %v1171, 0
        %v1209 = vsel %vm635, %v1172, 0
        %v1212 = vsel %vm635, %v1173, 0
        %v1215 = vsel %vm635, %v1174, 0
        %v1218 = vsel %vm635, %v1175, 0
        %v1221 = vsel %vm635, %v1176, 0
        %v1224 = vsel %vm635, %v1177, 0
        %v1227 = vsel %vm684, %v1129, 0
        %1229 = vmatpush.bf16.msra.mxu0 0
        %1230 = vmatpush.bf16.msra.mxu0 0
        %1231 = vmatpush.bf16.msra.mxu0 0
        %1232 = vmatpush.bf16.msra.mxu0 0
        %1233 = vmatpush.bf16.msra.mxu0 0
        %1234 = vmatpush.bf16.msra.mxu0 0
        %1235 = vmatpush.bf16.msra.mxu0 0
        %1236 = vmatpush.bf16.msra.mxu0 %v1227
        %1237 = vmatmul.bf16.gmra.mxu0 %v1179
        %v1238 = vpop.f32.mrf.mxu0
        %v1239 = vadd.f32 0.0, %v1238
        %v1240 = vpop.f32.mrf.mxu0
        %v1241 = vadd.f32 0.0, %v1240
        %1242 = vmatmul.bf16.gmra.mxu0 %v1182
        %v1243 = vpop.f32.mrf.mxu0
        %v1244 = vadd.f32 0.0, %v1243
        %v1245 = vpop.f32.mrf.mxu0
        %v1246 = vadd.f32 0.0, %v1245
        %1247 = vmatmul.bf16.gmra.mxu0 %v1185
        %v1248 = vpop.f32.mrf.mxu0
        %v1249 = vadd.f32 0.0, %v1248
        %v1250 = vpop.f32.mrf.mxu0
        %v1251 = vadd.f32 0.0, %v1250
        %1252 = vmatmul.bf16.gmra.mxu0 %v1188
        %v1253 = vpop.f32.mrf.mxu0
        %v1254 = vadd.f32 0.0, %v1253
        %v1255 = vpop.f32.mrf.mxu0
        %v1256 = vadd.f32 0.0, %v1255
        %1257 = vmatmul.bf16.gmra.mxu0 %v1191
        %v1258 = vpop.f32.mrf.mxu0
        %v1259 = vadd.f32 0.0, %v1258
        %v1260 = vpop.f32.mrf.mxu0
        %v1261 = vadd.f32 0.0, %v1260
        %1262 = vmatmul.bf16.gmra.mxu0 %v1194
        %v1263 = vpop.f32.mrf.mxu0
        %v1264 = vadd.f32 0.0, %v1263
        %v1265 = vpop.f32.mrf.mxu0
        %v1266 = vadd.f32 0.0, %v1265
        %1267 = vmatmul.bf16.gmra.mxu0 %v1197
        %v1268 = vpop.f32.mrf.mxu0
        %v1269 = vadd.f32 0.0, %v1268
        %v1270 = vpop.f32.mrf.mxu0
        %v1271 = vadd.f32 0.0, %v1270
        %1272 = vmatmul.bf16.gmra.mxu0 %v1200
        %v1273 = vpop.f32.mrf.mxu0
        %v1274 = vadd.f32 0.0, %v1273
        %v1275 = vpop.f32.mrf.mxu0
        %v1276 = vadd.f32 0.0, %v1275
        %1277 = vmatmul.bf16.gmra.mxu0 %v1203
        %v1278 = vpop.f32.mrf.mxu0
        %v1279 = vadd.f32 0.0, %v1278
        %v1280 = vpop.f32.mrf.mxu0
        %v1281 = vadd.f32 0.0, %v1280
        %1282 = vmatmul.bf16.gmra.mxu0 %v1206
        %v1283 = vpop.f32.mrf.mxu0
        %v1284 = vadd.f32 0.0, %v1283
        %v1285 = vpop.f32.mrf.mxu0
        %v1286 = vadd.f32 0.0, %v1285
        %1287 = vmatmul.bf16.gmra.mxu0 %v1209
        %v1288 = vpop.f32.mrf.mxu0
        %v1289 = vadd.f32 0.0, %v1288
        %v1290 = vpop.f32.mrf.mxu0
        %v1291 = vadd.f32 0.0, %v1290
        %1292 = vmatmul.bf16.gmra.mxu0 %v1212
        %v1293 = vpop.f32.mrf.mxu0
        %v1294 = vadd.f32 0.0, %v1293
        %v1295 = vpop.f32.mrf.mxu0
        %v1296 = vadd.f32 0.0, %v1295
        %1297 = vmatmul.bf16.gmra.mxu0 %v1215
        %v1298 = vpop.f32.mrf.mxu0
        %v1299 = vadd.f32 0.0, %v1298
        %v1300 = vpop.f32.mrf.mxu0
        %v1301 = vadd.f32 0.0, %v1300
        %1302 = vmatmul.bf16.gmra.mxu0 %v1218
        %v1303 = vpop.f32.mrf.mxu0
        %v1304 = vadd.f32 0.0, %v1303
        %v1305 = vpop.f32.mrf.mxu0
        %v1306 = vadd.f32 0.0, %v1305
        %1307 = vmatmul.bf16.gmra.mxu0 %v1221
        %v1308 = vpop.f32.mrf.mxu0
        %v1309 = vadd.f32 0.0, %v1308
        %v1310 = vpop.f32.mrf.mxu0
        %v1311 = vadd.f32 0.0, %v1310
        %1312 = vmatmul.bf16.gmra.mxu0 %v1224
        %v1313 = vpop.f32.mrf.mxu0
        %v1314 = vadd.f32 0.0, %v1313
        %v1315 = vpop.f32.mrf.mxu0
        %v1316 = vadd.f32 0.0, %v1315
        %1317 = vdwg.mxu0
        %v1318 = vadd.f32 %v918, %v1239
        %v1319 = vadd.f32 %v920, %v1241
        %v1320 = vadd.f32 %v923, %v1244
        %v1321 = vadd.f32 %v925, %v1246
        %v1322 = vadd.f32 %v928, %v1249
        %v1323 = vadd.f32 %v930, %v1251
        %v1324 = vadd.f32 %v933, %v1254
        %v1325 = vadd.f32 %v935, %v1256
        %v1326 = vadd.f32 %v938, %v1259
        %v1327 = vadd.f32 %v940, %v1261
        %v1328 = vadd.f32 %v943, %v1264
        %v1329 = vadd.f32 %v945, %v1266
        %v1330 = vadd.f32 %v948, %v1269
        %v1331 = vadd.f32 %v950, %v1271
        %v1332 = vadd.f32 %v953, %v1274
        %v1333 = vadd.f32 %v955, %v1276
        %v1334 = vadd.f32 %v958, %v1279
        %v1335 = vadd.f32 %v960, %v1281
        %v1336 = vadd.f32 %v963, %v1284
        %v1337 = vadd.f32 %v965, %v1286
        %v1338 = vadd.f32 %v968, %v1289
        %v1339 = vadd.f32 %v970, %v1291
        %v1340 = vadd.f32 %v973, %v1294
        %v1341 = vadd.f32 %v975, %v1296
        %v1342 = vadd.f32 %v978, %v1299
        %v1343 = vadd.f32 %v980, %v1301
        %v1344 = vadd.f32 %v983, %v1304
        %v1345 = vadd.f32 %v985, %v1306
        %v1346 = vadd.f32 %v988, %v1309
        %v1347 = vadd.f32 %v990, %v1311
        %v1348 = vadd.f32 %v993, %v1314
        %v1349 = vadd.f32 %v995, %v1316
        %s1350 = scalar_lea.vmem %s1, 12
        %v1351 = vld [vmem:[%s1350] sm:$0xf]
        %v1354 = vunpack.c.l.b16 %v191
        %v1355 = vunpack.c.l.b16 %v192
        %v1356 = vpack.c.b16 %v1355, %v1354
        %v1358 = vsel %vm635, %v1356, 0
        %v1361 = vsel %vm684, %v1351, 0
        %1363 = vmatpush.bf16.msra.mxu0 0
        %1364 = vmatpush.bf16.msra.mxu0 0
        %1365 = vmatpush.bf16.msra.mxu0 0
        %1366 = vmatpush.bf16.msra.mxu0 0
        %1367 = vmatpush.bf16.msra.mxu0 0
        %1368 = vmatpush.bf16.msra.mxu0 0
        %1369 = vmatpush.bf16.msra.mxu0 0
        %1370 = vmatpush.bf16.msra.mxu0 %v1361
        %1371 = vmatmul.bf16.gmra.mxu0 %v861
        %v1372 = vpop.f32.mrf.mxu0
        %v1373 = vadd.f32 0.0, %v1372
        %v1374 = vpop.f32.mrf.mxu0
        %v1375 = vadd.f32 0.0, %v1374
        %1376 = vmatmul.bf16.gmra.mxu0 %v864
        %v1377 = vpop.f32.mrf.mxu0
        %v1378 = vadd.f32 0.0, %v1377
        %v1379 = vpop.f32.mrf.mxu0
        %v1380 = vadd.f32 0.0, %v1379
        %1381 = vmatmul.bf16.gmra.mxu0 %v867
        %v1382 = vpop.f32.mrf.mxu0
        %v1383 = vadd.f32 0.0, %v1382
        %v1384 = vpop.f32.mrf.mxu0
        %v1385 = vadd.f32 0.0, %v1384
        %1386 = vmatmul.bf16.gmra.mxu0 %v870
        %v1387 = vpop.f32.mrf.mxu0
        %v1388 = vadd.f32 0.0, %v1387
        %v1389 = vpop.f32.mrf.mxu0
        %v1390 = vadd.f32 0.0, %v1389
        %1391 = vmatmul.bf16.gmra.mxu0 %v873
        %v1392 = vpop.f32.mrf.mxu0
        %v1393 = vadd.f32 0.0, %v1392
        %v1394 = vpop.f32.mrf.mxu0
        %v1395 = vadd.f32 0.0, %v1394
        %1396 = vmatmul.bf16.gmra.mxu0 %v876
        %v1397 = vpop.f32.mrf.mxu0
        %v1398 = vadd.f32 0.0, %v1397
        %v1399 = vpop.f32.mrf.mxu0
        %v1400 = vadd.f32 0.0, %v1399
        %1401 = vmatmul.bf16.gmra.mxu0 %v879
        %v1402 = vpop.f32.mrf.mxu0
        %v1403 = vadd.f32 0.0, %v1402
        %v1404 = vpop.f32.mrf.mxu0
        %v1405 = vadd.f32 0.0, %v1404
        %1406 = vmatmul.bf16.gmra.mxu0 %v882
        %v1407 = vpop.f32.mrf.mxu0
        %v1408 = vadd.f32 0.0, %v1407
        %v1409 = vpop.f32.mrf.mxu0
        %v1410 = vadd.f32 0.0, %v1409
        %1411 = vmatmul.bf16.gmra.mxu0 %v885
        %v1412 = vpop.f32.mrf.mxu0
        %v1413 = vadd.f32 0.0, %v1412
        %v1414 = vpop.f32.mrf.mxu0
        %v1415 = vadd.f32 0.0, %v1414
        %1416 = vmatmul.bf16.gmra.mxu0 %v888
        %v1417 = vpop.f32.mrf.mxu0
        %v1418 = vadd.f32 0.0, %v1417
        %v1419 = vpop.f32.mrf.mxu0
        %v1420 = vadd.f32 0.0, %v1419
        %1421 = vmatmul.bf16.gmra.mxu0 %v891
        %v1422 = vpop.f32.mrf.mxu0
        %v1423 = vadd.f32 0.0, %v1422
        %v1424 = vpop.f32.mrf.mxu0
        %v1425 = vadd.f32 0.0, %v1424
        %1426 = vmatmul.bf16.gmra.mxu0 %v894
        %v1427 = vpop.f32.mrf.mxu0
        %v1428 = vadd.f32 0.0, %v1427
        %v1429 = vpop.f32.mrf.mxu0
        %v1430 = vadd.f32 0.0, %v1429
        %1431 = vmatmul.bf16.gmra.mxu0 %v897
        %v1432 = vpop.f32.mrf.mxu0
        %v1433 = vadd.f32 0.0, %v1432
        %v1434 = vpop.f32.mrf.mxu0
        %v1435 = vadd.f32 0.0, %v1434
        %1436 = vmatmul.bf16.gmra.mxu0 %v900
        %v1437 = vpop.f32.mrf.mxu0
        %v1438 = vadd.f32 0.0, %v1437
        %v1439 = vpop.f32.mrf.mxu0
        %v1440 = vadd.f32 0.0, %v1439
        %1441 = vmatmul.bf16.gmra.mxu0 %v903
        %v1442 = vpop.f32.mrf.mxu0
        %v1443 = vadd.f32 0.0, %v1442
        %v1444 = vpop.f32.mrf.mxu0
        %v1445 = vadd.f32 0.0, %v1444
        %1446 = vmatmul.bf16.gmra.mxu0 %v1358
        %v1447 = vpop.f32.mrf.mxu0
        %v1448 = vadd.f32 0.0, %v1447
        %v1449 = vpop.f32.mrf.mxu0
        %v1450 = vadd.f32 0.0, %v1449
        %1451 = vdwg.mxu0
        %v1452 = vadd.f32 %v1318, %v1373
        %v1453 = vadd.f32 %v1319, %v1375
        %v1454 = vadd.f32 %v1320, %v1378
        %v1455 = vadd.f32 %v1321, %v1380
        %v1456 = vadd.f32 %v1322, %v1383
        %v1457 = vadd.f32 %v1323, %v1385
        %v1458 = vadd.f32 %v1324, %v1388
        %v1459 = vadd.f32 %v1325, %v1390
        %v1460 = vadd.f32 %v1326, %v1393
        %v1461 = vadd.f32 %v1327, %v1395
        %v1462 = vadd.f32 %v1328, %v1398
        %v1463 = vadd.f32 %v1329, %v1400
        %v1464 = vadd.f32 %v1330, %v1403
        %v1465 = vadd.f32 %v1331, %v1405
        %v1466 = vadd.f32 %v1332, %v1408
        %v1467 = vadd.f32 %v1333, %v1410
        %v1468 = vadd.f32 %v1334, %v1413
        %v1469 = vadd.f32 %v1335, %v1415
        %v1470 = vadd.f32 %v1336, %v1418
        %v1471 = vadd.f32 %v1337, %v1420
        %v1472 = vadd.f32 %v1338, %v1423
        %v1473 = vadd.f32 %v1339, %v1425
        %v1474 = vadd.f32 %v1340, %v1428
        %v1475 = vadd.f32 %v1341, %v1430
        %v1476 = vadd.f32 %v1342, %v1433
        %v1477 = vadd.f32 %v1343, %v1435
        %v1478 = vadd.f32 %v1344, %v1438
        %v1479 = vadd.f32 %v1345, %v1440
        %v1480 = vadd.f32 %v1346, %v1443
        %v1481 = vadd.f32 %v1347, %v1445
        %v1482 = vadd.f32 %v1348, %v1448
        %v1483 = vadd.f32 %v1349, %v1450
        %v1485 = vshrl.u32 %v191, 16
        %v1487 = vrot.slane %v1485, 4
        %v1488 = vshll.u32 %v191, 16
        %v1490 = vrot.slane %v1488, 5
        %v1491 = vor.u32 %v1487, %v1490
        %v1492 = vrot.slane %v1491, 4
        %v1494 = vshll.u32 %v192, 16
        %v1496 = vrot.slane %v1494, 5
        %v1497 = vsel %vm200, %v1492, %v1496
        %v1498 = vshrl.u32 %v192, 16
        %v1500 = vrot.slane %v1498, 4
        %v1501 = vor.u32 %v1500, %v1496
        %v1502 = vrot.slane %v1501, 4
        %v1504 = vshll.u32 %v193, 16
        %v1506 = vrot.slane %v1504, 5
        %v1507 = vsel %vm200, %v1502, %v1506
        %s1508 = scalar_lea.vmem %s1, 16
        %v1509 = vld [vmem:[%s1508] sm:$0xf]
        %v1510 = vunpack.c.l.b16 %v1497
        %v1511 = vunpack.c.l.b16 %v1507
        %v1512 = vpack.c.b16 %v1511, %v1510
        %v1514 = vsel %vm635, %v1512, 0
        %v1517 = vsel %vm684, %v1509, 0
        %1519 = vmatpush.bf16.msra.mxu0 0
        %1520 = vmatpush.bf16.msra.mxu0 0
        %1521 = vmatpush.bf16.msra.mxu0 0
        %1522 = vmatpush.bf16.msra.mxu0 0
        %1523 = vmatpush.bf16.msra.mxu0 0
        %1524 = vmatpush.bf16.msra.mxu0 0
        %1525 = vmatpush.bf16.msra.mxu0 0
        %1526 = vmatpush.bf16.msra.mxu0 %v1517
        %1527 = vmatmul.bf16.gmra.mxu0 %v640
        %v1528 = vpop.f32.mrf.mxu0
        %v1529 = vadd.f32 0.0, %v1528
        %v1530 = vpop.f32.mrf.mxu0
        %v1531 = vadd.f32 0.0, %v1530
        %1532 = vmatmul.bf16.gmra.mxu0 %v643
        %v1533 = vpop.f32.mrf.mxu0
        %v1534 = vadd.f32 0.0, %v1533
        %v1535 = vpop.f32.mrf.mxu0
        %v1536 = vadd.f32 0.0, %v1535
        %1537 = vmatmul.bf16.gmra.mxu0 %v646
        %v1538 = vpop.f32.mrf.mxu0
        %v1539 = vadd.f32 0.0, %v1538
        %v1540 = vpop.f32.mrf.mxu0
        %v1541 = vadd.f32 0.0, %v1540
        %1542 = vmatmul.bf16.gmra.mxu0 %v649
        %v1543 = vpop.f32.mrf.mxu0
        %v1544 = vadd.f32 0.0, %v1543
        %v1545 = vpop.f32.mrf.mxu0
        %v1546 = vadd.f32 0.0, %v1545
        %1547 = vmatmul.bf16.gmra.mxu0 %v652
        %v1548 = vpop.f32.mrf.mxu0
        %v1549 = vadd.f32 0.0, %v1548
        %v1550 = vpop.f32.mrf.mxu0
        %v1551 = vadd.f32 0.0, %v1550
        %1552 = vmatmul.bf16.gmra.mxu0 %v655
        %v1553 = vpop.f32.mrf.mxu0
        %v1554 = vadd.f32 0.0, %v1553
        %v1555 = vpop.f32.mrf.mxu0
        %v1556 = vadd.f32 0.0, %v1555
        %1557 = vmatmul.bf16.gmra.mxu0 %v658
        %v1558 = vpop.f32.mrf.mxu0
        %v1559 = vadd.f32 0.0, %v1558
        %v1560 = vpop.f32.mrf.mxu0
        %v1561 = vadd.f32 0.0, %v1560
        %1562 = vmatmul.bf16.gmra.mxu0 %v661
        %v1563 = vpop.f32.mrf.mxu0
        %v1564 = vadd.f32 0.0, %v1563
        %v1565 = vpop.f32.mrf.mxu0
        %v1566 = vadd.f32 0.0, %v1565
        %1567 = vmatmul.bf16.gmra.mxu0 %v664
        %v1568 = vpop.f32.mrf.mxu0
        %v1569 = vadd.f32 0.0, %v1568
        %v1570 = vpop.f32.mrf.mxu0
        %v1571 = vadd.f32 0.0, %v1570
        %1572 = vmatmul.bf16.gmra.mxu0 %v667
        %v1573 = vpop.f32.mrf.mxu0
        %v1574 = vadd.f32 0.0, %v1573
        %v1575 = vpop.f32.mrf.mxu0
        %v1576 = vadd.f32 0.0, %v1575
        %1577 = vmatmul.bf16.gmra.mxu0 %v670
        %v1578 = vpop.f32.mrf.mxu0
        %v1579 = vadd.f32 0.0, %v1578
        %v1580 = vpop.f32.mrf.mxu0
        %v1581 = vadd.f32 0.0, %v1580
        %1582 = vmatmul.bf16.gmra.mxu0 %v673
        %v1583 = vpop.f32.mrf.mxu0
        %v1584 = vadd.f32 0.0, %v1583
        %v1585 = vpop.f32.mrf.mxu0
        %v1586 = vadd.f32 0.0, %v1585
        %1587 = vmatmul.bf16.gmra.mxu0 %v676
        %v1588 = vpop.f32.mrf.mxu0
        %v1589 = vadd.f32 0.0, %v1588
        %v1590 = vpop.f32.mrf.mxu0
        %v1591 = vadd.f32 0.0, %v1590
        %1592 = vmatmul.bf16.gmra.mxu0 %v679
        %v1593 = vpop.f32.mrf.mxu0
        %v1594 = vadd.f32 0.0, %v1593
        %v1595 = vpop.f32.mrf.mxu0
        %v1596 = vadd.f32 0.0, %v1595
        %1597 = vmatmul.bf16.gmra.mxu0 %v682
        %v1598 = vpop.f32.mrf.mxu0
        %v1599 = vadd.f32 0.0, %v1598
        %v1600 = vpop.f32.mrf.mxu0
        %v1601 = vadd.f32 0.0, %v1600
        %1602 = vmatmul.bf16.gmra.mxu0 %v1514
        %v1603 = vpop.f32.mrf.mxu0
        %v1604 = vadd.f32 0.0, %v1603
        %v1605 = vpop.f32.mrf.mxu0
        %v1606 = vadd.f32 0.0, %v1605
        %1607 = vdwg.mxu0
        %v1608 = vadd.f32 %v1452, %v1529
        %v1609 = vadd.f32 %v1453, %v1531
        %v1610 = vadd.f32 %v1454, %v1534
        %v1611 = vadd.f32 %v1455, %v1536
        %v1612 = vadd.f32 %v1456, %v1539
        %v1613 = vadd.f32 %v1457, %v1541
        %v1614 = vadd.f32 %v1458, %v1544
        %v1615 = vadd.f32 %v1459, %v1546
        %v1616 = vadd.f32 %v1460, %v1549
        %v1617 = vadd.f32 %v1461, %v1551
        %v1618 = vadd.f32 %v1462, %v1554
        %v1619 = vadd.f32 %v1463, %v1556
        %v1620 = vadd.f32 %v1464, %v1559
        %v1621 = vadd.f32 %v1465, %v1561
        %v1622 = vadd.f32 %v1466, %v1564
        %v1623 = vadd.f32 %v1467, %v1566
        %v1624 = vadd.f32 %v1468, %v1569
        %v1625 = vadd.f32 %v1469, %v1571
        %v1626 = vadd.f32 %v1470, %v1574
        %v1627 = vadd.f32 %v1471, %v1576
        %v1628 = vadd.f32 %v1472, %v1579
        %v1629 = vadd.f32 %v1473, %v1581
        %v1630 = vadd.f32 %v1474, %v1584
        %v1631 = vadd.f32 %v1475, %v1586
        %v1632 = vadd.f32 %v1476, %v1589
        %v1633 = vadd.f32 %v1477, %v1591
        %v1634 = vadd.f32 %v1478, %v1594
        %v1635 = vadd.f32 %v1479, %v1596
        %v1636 = vadd.f32 %v1480, %v1599
        %v1637 = vadd.f32 %v1481, %v1601
        %v1638 = vadd.f32 %v1482, %v1604
        %v1639 = vadd.f32 %v1483, %v1606
        %v1641 = vrot.slane %v191, 5
        %v1642 = vrot.slane %v1641, 4
        %v1643 = vrot.slane %v192, 5
        %v1644 = vsel %vm1015, %v1642, %v1643
        %v1645 = vrot.slane %v1643, 4
        %v1646 = vrot.slane %v193, 5
        %v1647 = vsel %vm1015, %v1645, %v1646
        %s1648 = scalar_lea.vmem %s1, 20
        %v1649 = vld [vmem:[%s1648] sm:$0xf]
        %v1650 = vunpack.c.l.b16 %v1644
        %v1651 = vunpack.c.l.b16 %v1647
        %v1652 = vpack.c.b16 %v1651, %v1650
        %v1654 = vsel %vm635, %v1652, 0
        %v1657 = vsel %vm684, %v1649, 0
        %1659 = vmatpush.bf16.msra.mxu0 0
        %1660 = vmatpush.bf16.msra.mxu0 0
        %1661 = vmatpush.bf16.msra.mxu0 0
        %1662 = vmatpush.bf16.msra.mxu0 0
        %1663 = vmatpush.bf16.msra.mxu0 0
        %1664 = vmatpush.bf16.msra.mxu0 0
        %1665 = vmatpush.bf16.msra.mxu0 0
        %1666 = vmatpush.bf16.msra.mxu0 %v1657
        %1667 = vmatmul.bf16.gmra.mxu0 %v1182
        %v1668 = vpop.f32.mrf.mxu0
        %v1669 = vadd.f32 0.0, %v1668
        %v1670 = vpop.f32.mrf.mxu0
        %v1671 = vadd.f32 0.0, %v1670
        %1672 = vmatmul.bf16.gmra.mxu0 %v1185
        %v1673 = vpop.f32.mrf.mxu0
        %v1674 = vadd.f32 0.0, %v1673
        %v1675 = vpop.f32.mrf.mxu0
        %v1676 = vadd.f32 0.0, %v1675
        %1677 = vmatmul.bf16.gmra.mxu0 %v1188
        %v1678 = vpop.f32.mrf.mxu0
        %v1679 = vadd.f32 0.0, %v1678
        %v1680 = vpop.f32.mrf.mxu0
        %v1681 = vadd.f32 0.0, %v1680
        %1682 = vmatmul.bf16.gmra.mxu0 %v1191
        %v1683 = vpop.f32.mrf.mxu0
        %v1684 = vadd.f32 0.0, %v1683
        %v1685 = vpop.f32.mrf.mxu0
        %v1686 = vadd.f32 0.0, %v1685
        %1687 = vmatmul.bf16.gmra.mxu0 %v1194
        %v1688 = vpop.f32.mrf.mxu0
        %v1689 = vadd.f32 0.0, %v1688
        %v1690 = vpop.f32.mrf.mxu0
        %v1691 = vadd.f32 0.0, %v1690
        %1692 = vmatmul.bf16.gmra.mxu0 %v1197
        %v1693 = vpop.f32.mrf.mxu0
        %v1694 = vadd.f32 0.0, %v1693
        %v1695 = vpop.f32.mrf.mxu0
        %v1696 = vadd.f32 0.0, %v1695
        %1697 = vmatmul.bf16.gmra.mxu0 %v1200
        %v1698 = vpop.f32.mrf.mxu0
        %v1699 = vadd.f32 0.0, %v1698
        %v1700 = vpop.f32.mrf.mxu0
        %v1701 = vadd.f32 0.0, %v1700
        %1702 = vmatmul.bf16.gmra.mxu0 %v1203
        %v1703 = vpop.f32.mrf.mxu0
        %v1704 = vadd.f32 0.0, %v1703
        %v1705 = vpop.f32.mrf.mxu0
        %v1706 = vadd.f32 0.0, %v1705
        %1707 = vmatmul.bf16.gmra.mxu0 %v1206
        %v1708 = vpop.f32.mrf.mxu0
        %v1709 = vadd.f32 0.0, %v1708
        %v1710 = vpop.f32.mrf.mxu0
        %v1711 = vadd.f32 0.0, %v1710
        %1712 = vmatmul.bf16.gmra.mxu0 %v1209
        %v1713 = vpop.f32.mrf.mxu0
        %v1714 = vadd.f32 0.0, %v1713
        %v1715 = vpop.f32.mrf.mxu0
        %v1716 = vadd.f32 0.0, %v1715
        %1717 = vmatmul.bf16.gmra.mxu0 %v1212
        %v1718 = vpop.f32.mrf.mxu0
        %v1719 = vadd.f32 0.0, %v1718
        %v1720 = vpop.f32.mrf.mxu0
        %v1721 = vadd.f32 0.0, %v1720
        %1722 = vmatmul.bf16.gmra.mxu0 %v1215
        %v1723 = vpop.f32.mrf.mxu0
        %v1724 = vadd.f32 0.0, %v1723
        %v1725 = vpop.f32.mrf.mxu0
        %v1726 = vadd.f32 0.0, %v1725
        %1727 = vmatmul.bf16.gmra.mxu0 %v1218
        %v1728 = vpop.f32.mrf.mxu0
        %v1729 = vadd.f32 0.0, %v1728
        %v1730 = vpop.f32.mrf.mxu0
        %v1731 = vadd.f32 0.0, %v1730
        %1732 = vmatmul.bf16.gmra.mxu0 %v1221
        %v1733 = vpop.f32.mrf.mxu0
        %v1734 = vadd.f32 0.0, %v1733
        %v1735 = vpop.f32.mrf.mxu0
        %v1736 = vadd.f32 0.0, %v1735
        %1737 = vmatmul.bf16.gmra.mxu0 %v1224
        %v1738 = vpop.f32.mrf.mxu0
        %v1739 = vadd.f32 0.0, %v1738
        %v1740 = vpop.f32.mrf.mxu0
        %v1741 = vadd.f32 0.0, %v1740
        %1742 = vmatmul.bf16.gmra.mxu0 %v1654
        %v1743 = vpop.f32.mrf.mxu0
        %v1744 = vadd.f32 0.0, %v1743
        %v1745 = vpop.f32.mrf.mxu0
        %v1746 = vadd.f32 0.0, %v1745
        %1747 = vdwg.mxu0
        %v1748 = vadd.f32 %v1608, %v1669
        %v1749 = vadd.f32 %v1609, %v1671
        %v1750 = vadd.f32 %v1610, %v1674
        %v1751 = vadd.f32 %v1611, %v1676
        %v1752 = vadd.f32 %v1612, %v1679
        %v1753 = vadd.f32 %v1613, %v1681
        %v1754 = vadd.f32 %v1614, %v1684
        %v1755 = vadd.f32 %v1615, %v1686
        %v1756 = vadd.f32 %v1616, %v1689
        %v1757 = vadd.f32 %v1617, %v1691
        %v1758 = vadd.f32 %v1618, %v1694
        %v1759 = vadd.f32 %v1619, %v1696
        %v1760 = vadd.f32 %v1620, %v1699
        %v1761 = vadd.f32 %v1621, %v1701
        %v1762 = vadd.f32 %v1622, %v1704
        %v1763 = vadd.f32 %v1623, %v1706
        %v1764 = vadd.f32 %v1624, %v1709
        %v1765 = vadd.f32 %v1625, %v1711
        %v1766 = vadd.f32 %v1626, %v1714
        %v1767 = vadd.f32 %v1627, %v1716
        %v1768 = vadd.f32 %v1628, %v1719
        %v1769 = vadd.f32 %v1629, %v1721
        %v1770 = vadd.f32 %v1630, %v1724
        %v1771 = vadd.f32 %v1631, %v1726
        %v1772 = vadd.f32 %v1632, %v1729
        %v1773 = vadd.f32 %v1633, %v1731
        %v1774 = vadd.f32 %v1634, %v1734
        %v1775 = vadd.f32 %v1635, %v1736
        %v1776 = vadd.f32 %v1636, %v1739
        %v1777 = vadd.f32 %v1637, %v1741
        %v1778 = vadd.f32 %v1638, %v1744
        %v1779 = vadd.f32 %v1639, %v1746
        %s1780 = scalar_lea.vmem %s1, 24
        %v1781 = vld [vmem:[%s1780] sm:$0xf]
        %v1784 = vunpack.c.l.b16 %v194
        %v1785 = vunpack.c.l.b16 %v195
        %v1786 = vpack.c.b16 %v1785, %v1784
        %v1788 = vsel %vm635, %v1786, 0
        %v1791 = vsel %vm684, %v1781, 0
        %1793 = vmatpush.bf16.msra.mxu0 0
        %1794 = vmatpush.bf16.msra.mxu0 0
        %1795 = vmatpush.bf16.msra.mxu0 0
        %1796 = vmatpush.bf16.msra.mxu0 0
        %1797 = vmatpush.bf16.msra.mxu0 0
        %1798 = vmatpush.bf16.msra.mxu0 0
        %1799 = vmatpush.bf16.msra.mxu0 0
        %1800 = vmatpush.bf16.msra.mxu0 %v1791
        %1801 = vmatmul.bf16.gmra.mxu0 %v864
        %v1802 = vpop.f32.mrf.mxu0
        %v1803 = vadd.f32 0.0, %v1802
        %v1804 = vpop.f32.mrf.mxu0
        %v1805 = vadd.f32 0.0, %v1804
        %1806 = vmatmul.bf16.gmra.mxu0 %v867
        %v1807 = vpop.f32.mrf.mxu0
        %v1808 = vadd.f32 0.0, %v1807
        %v1809 = vpop.f32.mrf.mxu0
        %v1810 = vadd.f32 0.0, %v1809
        %1811 = vmatmul.bf16.gmra.mxu0 %v870
        %v1812 = vpop.f32.mrf.mxu0
        %v1813 = vadd.f32 0.0, %v1812
        %v1814 = vpop.f32.mrf.mxu0
        %v1815 = vadd.f32 0.0, %v1814
        %1816 = vmatmul.bf16.gmra.mxu0 %v873
        %v1817 = vpop.f32.mrf.mxu0
        %v1818 = vadd.f32 0.0, %v1817
        %v1819 = vpop.f32.mrf.mxu0
        %v1820 = vadd.f32 0.0, %v1819
        %1821 = vmatmul.bf16.gmra.mxu0 %v876
        %v1822 = vpop.f32.mrf.mxu0
        %v1823 = vadd.f32 0.0, %v1822
        %v1824 = vpop.f32.mrf.mxu0
        %v1825 = vadd.f32 0.0, %v1824
        %1826 = vmatmul.bf16.gmra.mxu0 %v879
        %v1827 = vpop.f32.mrf.mxu0
        %v1828 = vadd.f32 0.0, %v1827
        %v1829 = vpop.f32.mrf.mxu0
        %v1830 = vadd.f32 0.0, %v1829
        %1831 = vmatmul.bf16.gmra.mxu0 %v882
        %v1832 = vpop.f32.mrf.mxu0
        %v1833 = vadd.f32 0.0, %v1832
        %v1834 = vpop.f32.mrf.mxu0
        %v1835 = vadd.f32 0.0, %v1834
        %1836 = vmatmul.bf16.gmra.mxu0 %v885
        %v1837 = vpop.f32.mrf.mxu0
        %v1838 = vadd.f32 0.0, %v1837
        %v1839 = vpop.f32.mrf.mxu0
        %v1840 = vadd.f32 0.0, %v1839
        %1841 = vmatmul.bf16.gmra.mxu0 %v888
        %v1842 = vpop.f32.mrf.mxu0
        %v1843 = vadd.f32 0.0, %v1842
        %v1844 = vpop.f32.mrf.mxu0
        %v1845 = vadd.f32 0.0, %v1844
        %1846 = vmatmul.bf16.gmra.mxu0 %v891
        %v1847 = vpop.f32.mrf.mxu0
        %v1848 = vadd.f32 0.0, %v1847
        %v1849 = vpop.f32.mrf.mxu0
        %v1850 = vadd.f32 0.0, %v1849
        %1851 = vmatmul.bf16.gmra.mxu0 %v894
        %v1852 = vpop.f32.mrf.mxu0
        %v1853 = vadd.f32 0.0, %v1852
        %v1854 = vpop.f32.mrf.mxu0
        %v1855 = vadd.f32 0.0, %v1854
        %1856 = vmatmul.bf16.gmra.mxu0 %v897
        %v1857 = vpop.f32.mrf.mxu0
        %v1858 = vadd.f32 0.0, %v1857
        %v1859 = vpop.f32.mrf.mxu0
        %v1860 = vadd.f32 0.0, %v1859
        %1861 = vmatmul.bf16.gmra.mxu0 %v900
        %v1862 = vpop.f32.mrf.mxu0
        %v1863 = vadd.f32 0.0, %v1862
        %v1864 = vpop.f32.mrf.mxu0
        %v1865 = vadd.f32 0.0, %v1864
        %1866 = vmatmul.bf16.gmra.mxu0 %v903
        %v1867 = vpop.f32.mrf.mxu0
        %v1868 = vadd.f32 0.0, %v1867
        %v1869 = vpop.f32.mrf.mxu0
        %v1870 = vadd.f32 0.0, %v1869
        %1871 = vmatmul.bf16.gmra.mxu0 %v1358
        %v1872 = vpop.f32.mrf.mxu0
        %v1873 = vadd.f32 0.0, %v1872
        %v1874 = vpop.f32.mrf.mxu0
        %v1875 = vadd.f32 0.0, %v1874
        %1876 = vmatmul.bf16.gmra.mxu0 %v1788
        %v1877 = vpop.f32.mrf.mxu0
        %v1878 = vadd.f32 0.0, %v1877
        %v1879 = vpop.f32.mrf.mxu0
        %v1880 = vadd.f32 0.0, %v1879
        %1881 = vdwg.mxu0
        %v1882 = vadd.f32 %v1748, %v1803
        %v1883 = vadd.f32 %v1749, %v1805
        %v1884 = vadd.f32 %v1750, %v1808
        %v1885 = vadd.f32 %v1751, %v1810
        %v1886 = vadd.f32 %v1752, %v1813
        %v1887 = vadd.f32 %v1753, %v1815
        %v1888 = vadd.f32 %v1754, %v1818
        %v1889 = vadd.f32 %v1755, %v1820
        %v1890 = vadd.f32 %v1756, %v1823
        %v1891 = vadd.f32 %v1757, %v1825
        %v1892 = vadd.f32 %v1758, %v1828
        %v1893 = vadd.f32 %v1759, %v1830
        %v1894 = vadd.f32 %v1760, %v1833
        %v1895 = vadd.f32 %v1761, %v1835
        %v1896 = vadd.f32 %v1762, %v1838
        %v1897 = vadd.f32 %v1763, %v1840
        %v1898 = vadd.f32 %v1764, %v1843
        %v1899 = vadd.f32 %v1765, %v1845
        %v1900 = vadd.f32 %v1766, %v1848
        %v1901 = vadd.f32 %v1767, %v1850
        %v1902 = vadd.f32 %v1768, %v1853
        %v1903 = vadd.f32 %v1769, %v1855
        %v1904 = vadd.f32 %v1770, %v1858
        %v1905 = vadd.f32 %v1771, %v1860
        %v1906 = vadd.f32 %v1772, %v1863
        %v1907 = vadd.f32 %v1773, %v1865
        %v1908 = vadd.f32 %v1774, %v1868
        %v1909 = vadd.f32 %v1775, %v1870
        %v1910 = vadd.f32 %v1776, %v1873
        %v1911 = vadd.f32 %v1777, %v1875
        %v1912 = vadd.f32 %v1778, %v1878
        %v1913 = vadd.f32 %v1779, %v1880
        %v1915 = vshrl.u32 %v194, 16
        %v1917 = vrot.slane %v1915, 4
        %v1918 = vshll.u32 %v194, 16
        %v1920 = vrot.slane %v1918, 5
        %v1921 = vor.u32 %v1917, %v1920
        %v1922 = vrot.slane %v1921, 4
        %v1924 = vshll.u32 %v195, 16
        %v1926 = vrot.slane %v1924, 5
        %v1927 = vsel %vm200, %v1922, %v1926
        %v1928 = vshrl.u32 %v195, 16
        %v1930 = vrot.slane %v1928, 4
        %v1931 = vor.u32 %v1930, %v1926
        %v1932 = vrot.slane %v1931, 4
        %v1934 = vshll.u32 %v196, 16
        %v1936 = vrot.slane %v1934, 5
        %v1937 = vsel %vm200, %v1932, %v1936
        %s1938 = scalar_lea.vmem %s1, 28
        %v1939 = vld [vmem:[%s1938] sm:$0xf]
        %v1940 = vunpack.c.l.b16 %v1927
        %v1941 = vunpack.c.l.b16 %v1937
        %v1942 = vpack.c.b16 %v1941, %v1940
        %v1944 = vsel %vm635, %v1942, 0
        %v1947 = vsel %vm684, %v1939, 0
        %1949 = vmatpush.bf16.msra.mxu0 0
        %1950 = vmatpush.bf16.msra.mxu0 0
        %1951 = vmatpush.bf16.msra.mxu0 0
        %1952 = vmatpush.bf16.msra.mxu0 0
        %1953 = vmatpush.bf16.msra.mxu0 0
        %1954 = vmatpush.bf16.msra.mxu0 0
        %1955 = vmatpush.bf16.msra.mxu0 0
        %1956 = vmatpush.bf16.msra.mxu0 %v1947
        %1957 = vmatmul.bf16.gmra.mxu0 %v643
        %v1958 = vpop.f32.mrf.mxu0
        %v1959 = vadd.f32 0.0, %v1958
        %v1960 = vpop.f32.mrf.mxu0
        %v1961 = vadd.f32 0.0, %v1960
        %1962 = vmatmul.bf16.gmra.mxu0 %v646
        %v1963 = vpop.f32.mrf.mxu0
        %v1964 = vadd.f32 0.0, %v1963
        %v1965 = vpop.f32.mrf.mxu0
        %v1966 = vadd.f32 0.0, %v1965
        %1967 = vmatmul.bf16.gmra.mxu0 %v649
        %v1968 = vpop.f32.mrf.mxu0
        %v1969 = vadd.f32 0.0, %v1968
        %v1970 = vpop.f32.mrf.mxu0
        %v1971 = vadd.f32 0.0, %v1970
        %1972 = vmatmul.bf16.gmra.mxu0 %v652
        %v1973 = vpop.f32.mrf.mxu0
        %v1974 = vadd.f32 0.0, %v1973
        %v1975 = vpop.f32.mrf.mxu0
        %v1976 = vadd.f32 0.0, %v1975
        %1977 = vmatmul.bf16.gmra.mxu0 %v655
        %v1978 = vpop.f32.mrf.mxu0
        %v1979 = vadd.f32 0.0, %v1978
        %v1980 = vpop.f32.mrf.mxu0
        %v1981 = vadd.f32 0.0, %v1980
        %1982 = vmatmul.bf16.gmra.mxu0 %v658
        %v1983 = vpop.f32.mrf.mxu0
        %v1984 = vadd.f32 0.0, %v1983
        %v1985 = vpop.f32.mrf.mxu0
        %v1986 = vadd.f32 0.0, %v1985
        %1987 = vmatmul.bf16.gmra.mxu0 %v661
        %v1988 = vpop.f32.mrf.mxu0
        %v1989 = vadd.f32 0.0, %v1988
        %v1990 = vpop.f32.mrf.mxu0
        %v1991 = vadd.f32 0.0, %v1990
        %1992 = vmatmul.bf16.gmra.mxu0 %v664
        %v1993 = vpop.f32.mrf.mxu0
        %v1994 = vadd.f32 0.0, %v1993
        %v1995 = vpop.f32.mrf.mxu0
        %v1996 = vadd.f32 0.0, %v1995
        %1997 = vmatmul.bf16.gmra.mxu0 %v667
        %v1998 = vpop.f32.mrf.mxu0
        %v1999 = vadd.f32 0.0, %v1998
        %v2000 = vpop.f32.mrf.mxu0
        %v2001 = vadd.f32 0.0, %v2000
        %2002 = vmatmul.bf16.gmra.mxu0 %v670
        %v2003 = vpop.f32.mrf.mxu0
        %v2004 = vadd.f32 0.0, %v2003
        %v2005 = vpop.f32.mrf.mxu0
        %v2006 = vadd.f32 0.0, %v2005
        %2007 = vmatmul.bf16.gmra.mxu0 %v673
        %v2008 = vpop.f32.mrf.mxu0
        %v2009 = vadd.f32 0.0, %v2008
        %v2010 = vpop.f32.mrf.mxu0
        %v2011 = vadd.f32 0.0, %v2010
        %2012 = vmatmul.bf16.gmra.mxu0 %v676
        %v2013 = vpop.f32.mrf.mxu0
        %v2014 = vadd.f32 0.0, %v2013
        %v2015 = vpop.f32.mrf.mxu0
        %v2016 = vadd.f32 0.0, %v2015
        %2017 = vmatmul.bf16.gmra.mxu0 %v679
        %v2018 = vpop.f32.mrf.mxu0
        %v2019 = vadd.f32 0.0, %v2018
        %v2020 = vpop.f32.mrf.mxu0
        %v2021 = vadd.f32 0.0, %v2020
        %2022 = vmatmul.bf16.gmra.mxu0 %v682
        %v2023 = vpop.f32.mrf.mxu0
        %v2024 = vadd.f32 0.0, %v2023
        %v2025 = vpop.f32.mrf.mxu0
        %v2026 = vadd.f32 0.0, %v2025
        %2027 = vmatmul.bf16.gmra.mxu0 %v1514
        %v2028 = vpop.f32.mrf.mxu0
        %v2029 = vadd.f32 0.0, %v2028
        %v2030 = vpop.f32.mrf.mxu0
        %v2031 = vadd.f32 0.0, %v2030
        %2032 = vmatmul.bf16.gmra.mxu0 %v1944
        %v2033 = vpop.f32.mrf.mxu0
        %v2034 = vadd.f32 0.0, %v2033
        %v2035 = vpop.f32.mrf.mxu0
        %v2036 = vadd.f32 0.0, %v2035
        %2037 = vdwg.mxu0
        %v2038 = vadd.f32 %v1882, %v1959
        %v2039 = vadd.f32 %v1883, %v1961
        %v2040 = vadd.f32 %v1884, %v1964
        %v2041 = vadd.f32 %v1885, %v1966
        %v2042 = vadd.f32 %v1886, %v1969
        %v2043 = vadd.f32 %v1887, %v1971
        %v2044 = vadd.f32 %v1888, %v1974
        %v2045 = vadd.f32 %v1889, %v1976
        %v2046 = vadd.f32 %v1890, %v1979
        %v2047 = vadd.f32 %v1891, %v1981
        %v2048 = vadd.f32 %v1892, %v1984
        %v2049 = vadd.f32 %v1893, %v1986
        %v2050 = vadd.f32 %v1894, %v1989
        %v2051 = vadd.f32 %v1895, %v1991
        %v2052 = vadd.f32 %v1896, %v1994
        %v2053 = vadd.f32 %v1897, %v1996
        %v2054 = vadd.f32 %v1898, %v1999
        %v2055 = vadd.f32 %v1899, %v2001
        %v2056 = vadd.f32 %v1900, %v2004
        %v2057 = vadd.f32 %v1901, %v2006
        %v2058 = vadd.f32 %v1902, %v2009
        %v2059 = vadd.f32 %v1903, %v2011
        %v2060 = vadd.f32 %v1904, %v2014
        %v2061 = vadd.f32 %v1905, %v2016
        %v2062 = vadd.f32 %v1906, %v2019
        %v2063 = vadd.f32 %v1907, %v2021
        %v2064 = vadd.f32 %v1908, %v2024
        %v2065 = vadd.f32 %v1909, %v2026
        %v2066 = vadd.f32 %v1910, %v2029
        %v2067 = vadd.f32 %v1911, %v2031
        %v2068 = vadd.f32 %v1912, %v2034
        %v2069 = vadd.f32 %v1913, %v2036
        %v2071 = vrot.slane %v194, 5
        %v2072 = vrot.slane %v2071, 4
        %v2073 = vrot.slane %v195, 5
        %v2074 = vsel %vm1015, %v2072, %v2073
        %v2075 = vrot.slane %v2073, 4
        %v2076 = vrot.slane %v196, 5
        %v2077 = vsel %vm1015, %v2075, %v2076
        %s2078 = scalar_lea.vmem %s1, 32
        %v2079 = vld [vmem:[%s2078] sm:$0xf]
        %v2080 = vunpack.c.l.b16 %v2074
        %v2081 = vunpack.c.l.b16 %v2077
        %v2082 = vpack.c.b16 %v2081, %v2080
        %v2084 = vsel %vm635, %v2082, 0
        %v2087 = vsel %vm684, %v2079, 0
        %2089 = vmatpush.bf16.msra.mxu0 0
        %2090 = vmatpush.bf16.msra.mxu0 0
        %2091 = vmatpush.bf16.msra.mxu0 0
        %2092 = vmatpush.bf16.msra.mxu0 0
        %2093 = vmatpush.bf16.msra.mxu0 0
        %2094 = vmatpush.bf16.msra.mxu0 0
        %2095 = vmatpush.bf16.msra.mxu0 0
        %2096 = vmatpush.bf16.msra.mxu0 %v2087
        %2097 = vmatmul.bf16.gmra.mxu0 %v1185
        %v2098 = vpop.f32.mrf.mxu0
        %v2099 = vadd.f32 0.0, %v2098
        %v2100 = vpop.f32.mrf.mxu0
        %v2101 = vadd.f32 0.0, %v2100
        %2102 = vmatmul.bf16.gmra.mxu0 %v1188
        %v2103 = vpop.f32.mrf.mxu0
        %v2104 = vadd.f32 0.0, %v2103
        %v2105 = vpop.f32.mrf.mxu0
        %v2106 = vadd.f32 0.0, %v2105
        %2107 = vmatmul.bf16.gmra.mxu0 %v1191
        %v2108 = vpop.f32.mrf.mxu0
        %v2109 = vadd.f32 0.0, %v2108
        %v2110 = vpop.f32.mrf.mxu0
        %v2111 = vadd.f32 0.0, %v2110
        %2112 = vmatmul.bf16.gmra.mxu0 %v1194
        %v2113 = vpop.f32.mrf.mxu0
        %v2114 = vadd.f32 0.0, %v2113
        %v2115 = vpop.f32.mrf.mxu0
        %v2116 = vadd.f32 0.0, %v2115
        %2117 = vmatmul.bf16.gmra.mxu0 %v1197
        %v2118 = vpop.f32.mrf.mxu0
        %v2119 = vadd.f32 0.0, %v2118
        %v2120 = vpop.f32.mrf.mxu0
        %v2121 = vadd.f32 0.0, %v2120
        %2122 = vmatmul.bf16.gmra.mxu0 %v1200
        %v2123 = vpop.f32.mrf.mxu0
        %v2124 = vadd.f32 0.0, %v2123
        %v2125 = vpop.f32.mrf.mxu0
        %v2126 = vadd.f32 0.0, %v2125
        %2127 = vmatmul.bf16.gmra.mxu0 %v1203
        %v2128 = vpop.f32.mrf.mxu0
        %v2129 = vadd.f32 0.0, %v2128
        %v2130 = vpop.f32.mrf.mxu0
        %v2131 = vadd.f32 0.0, %v2130
        %2132 = vmatmul.bf16.gmra.mxu0 %v1206
        %v2133 = vpop.f32.mrf.mxu0
        %v2134 = vadd.f32 0.0, %v2133
        %v2135 = vpop.f32.mrf.mxu0
        %v2136 = vadd.f32 0.0, %v2135
        %2137 = vmatmul.bf16.gmra.mxu0 %v1209
        %v2138 = vpop.f32.mrf.mxu0
        %v2139 = vadd.f32 0.0, %v2138
        %v2140 = vpop.f32.mrf.mxu0
        %v2141 = vadd.f32 0.0, %v2140
        %2142 = vmatmul.bf16.gmra.mxu0 %v1212
        %v2143 = vpop.f32.mrf.mxu0
        %v2144 = vadd.f32 0.0, %v2143
        %v2145 = vpop.f32.mrf.mxu0
        %v2146 = vadd.f32 0.0, %v2145
        %2147 = vmatmul.bf16.gmra.mxu0 %v1215
        %v2148 = vpop.f32.mrf.mxu0
        %v2149 = vadd.f32 0.0, %v2148
        %v2150 = vpop.f32.mrf.mxu0
        %v2151 = vadd.f32 0.0, %v2150
        %2152 = vmatmul.bf16.gmra.mxu0 %v1218
        %v2153 = vpop.f32.mrf.mxu0
        %v2154 = vadd.f32 0.0, %v2153
        %v2155 = vpop.f32.mrf.mxu0
        %v2156 = vadd.f32 0.0, %v2155
        %2157 = vmatmul.bf16.gmra.mxu0 %v1221
        %v2158 = vpop.f32.mrf.mxu0
        %v2159 = vadd.f32 0.0, %v2158
        %v2160 = vpop.f32.mrf.mxu0
        %v2161 = vadd.f32 0.0, %v2160
        %2162 = vmatmul.bf16.gmra.mxu0 %v1224
        %v2163 = vpop.f32.mrf.mxu0
        %v2164 = vadd.f32 0.0, %v2163
        %v2165 = vpop.f32.mrf.mxu0
        %v2166 = vadd.f32 0.0, %v2165
        %2167 = vmatmul.bf16.gmra.mxu0 %v1654
        %v2168 = vpop.f32.mrf.mxu0
        %v2169 = vadd.f32 0.0, %v2168
        %v2170 = vpop.f32.mrf.mxu0
        %v2171 = vadd.f32 0.0, %v2170
        %2172 = vmatmul.bf16.gmra.mxu0 %v2084
        %v2173 = vpop.f32.mrf.mxu0
        %v2174 = vadd.f32 0.0, %v2173
        %v2175 = vpop.f32.mrf.mxu0
        %v2176 = vadd.f32 0.0, %v2175
        %2177 = vdwg.mxu0
        %v2178 = vadd.f32 %v2038, %v2099
        %v2179 = vadd.f32 %v2039, %v2101
        %v2180 = vadd.f32 %v2040, %v2104
        %v2181 = vadd.f32 %v2041, %v2106
        %v2182 = vadd.f32 %v2042, %v2109
        %v2183 = vadd.f32 %v2043, %v2111
        %v2184 = vadd.f32 %v2044, %v2114
        %v2185 = vadd.f32 %v2045, %v2116
        %v2186 = vadd.f32 %v2046, %v2119
        %v2187 = vadd.f32 %v2047, %v2121
        %v2188 = vadd.f32 %v2048, %v2124
        %v2189 = vadd.f32 %v2049, %v2126
        %v2190 = vadd.f32 %v2050, %v2129
        %v2191 = vadd.f32 %v2051, %v2131
        %v2192 = vadd.f32 %v2052, %v2134
        %v2193 = vadd.f32 %v2053, %v2136
        %v2194 = vadd.f32 %v2054, %v2139
        %v2195 = vadd.f32 %v2055, %v2141
        %v2196 = vadd.f32 %v2056, %v2144
        %v2197 = vadd.f32 %v2057, %v2146
        %v2198 = vadd.f32 %v2058, %v2149
        %v2199 = vadd.f32 %v2059, %v2151
        %v2200 = vadd.f32 %v2060, %v2154
        %v2201 = vadd.f32 %v2061, %v2156
        %v2202 = vadd.f32 %v2062, %v2159
        %v2203 = vadd.f32 %v2063, %v2161
        %v2204 = vadd.f32 %v2064, %v2164
        %v2205 = vadd.f32 %v2065, %v2166
        %v2206 = vadd.f32 %v2066, %v2169
        %v2207 = vadd.f32 %v2067, %v2171
        %v2208 = vadd.f32 %v2068, %v2174
        %v2209 = vadd.f32 %v2069, %v2176
        %v2210 = vadd.f32 %v2178, %v2179
        %v2211 = vadd.f32 %v2210, %v2180
        %v2212 = vadd.f32 %v2211, %v2181
        %v2213 = vadd.f32 %v2212, %v2182
        %v2214 = vadd.f32 %v2213, %v2183
        %v2215 = vadd.f32 %v2214, %v2184
        %v2216 = vadd.f32 %v2215, %v2185
        %v2217 = vadd.f32 %v2216, %v2186
        %v2218 = vadd.f32 %v2217, %v2187
        %v2219 = vadd.f32 %v2218, %v2188
        %v2220 = vadd.f32 %v2219, %v2189
        %v2221 = vadd.f32 %v2220, %v2190
        %v2222 = vadd.f32 %v2221, %v2191
        %v2223 = vadd.f32 %v2222, %v2192
        %v2224 = vadd.f32 %v2223, %v2193
        %v2225 = vadd.f32 %v2224, %v2194
        %v2226 = vadd.f32 %v2225, %v2195
        %v2227 = vadd.f32 %v2226, %v2196
        %v2228 = vadd.f32 %v2227, %v2197
        %v2229 = vadd.f32 %v2228, %v2198
        %v2230 = vadd.f32 %v2229, %v2199
        %v2231 = vadd.f32 %v2230, %v2200
        %v2232 = vadd.f32 %v2231, %v2201
        %v2233 = vadd.f32 %v2232, %v2202
        %v2234 = vadd.f32 %v2233, %v2203
        %v2235 = vadd.f32 %v2234, %v2204
        %v2236 = vadd.f32 %v2235, %v2205
        %v2237 = vadd.f32 %v2236, %v2206
        %v2238 = vadd.f32 %v2237, %v2207
        %v2239 = vadd.f32 %v2238, %v2208
        %v2240 = vadd.f32 %v2239, %v2209
        %v2241 = vrot.slane %v2240, 4
        %v2242 = vadd.f32 %v2240, %v2241
        %v2243 = vrot.slane %v2242, 2
        %v2244 = vadd.f32 %v2242, %v2243
        %v2245 = vrot.slane %v2244, 1
        %v2246 = vadd.f32 %v2244, %v2245
        %2247 = vst [vmem:[%s136] sm:$0x1] %v2246
        %v2248 = vmul.f32 %v2178, %v2178
        %v2249 = vmul.f32 %v2179, %v2179
        %v2250 = vmul.f32 %v2180, %v2180
        %v2251 = vmul.f32 %v2181, %v2181
        %v2252 = vmul.f32 %v2182, %v2182
        %v2253 = vmul.f32 %v2183, %v2183
        %v2254 = vmul.f32 %v2184, %v2184
        %v2255 = vmul.f32 %v2185, %v2185
        %v2256 = vmul.f32 %v2186, %v2186
        %v2257 = vmul.f32 %v2187, %v2187
        %v2258 = vmul.f32 %v2188, %v2188
        %v2259 = vmul.f32 %v2189, %v2189
        %v2260 = vmul.f32 %v2190, %v2190
        %v2261 = vmul.f32 %v2191, %v2191
        %v2262 = vmul.f32 %v2192, %v2192
        %v2263 = vmul.f32 %v2193, %v2193
        %v2264 = vmul.f32 %v2194, %v2194
        %v2265 = vmul.f32 %v2195, %v2195
        %v2266 = vmul.f32 %v2196, %v2196
        %v2267 = vmul.f32 %v2197, %v2197
        %v2268 = vmul.f32 %v2198, %v2198
        %v2269 = vmul.f32 %v2199, %v2199
        %v2270 = vmul.f32 %v2200, %v2200
        %v2271 = vmul.f32 %v2201, %v2201
        %v2272 = vmul.f32 %v2202, %v2202
        %v2273 = vmul.f32 %v2203, %v2203
        %v2274 = vmul.f32 %v2204, %v2204
        %v2275 = vmul.f32 %v2205, %v2205
        %v2276 = vmul.f32 %v2206, %v2206
        %v2277 = vmul.f32 %v2207, %v2207
        %v2278 = vmul.f32 %v2208, %v2208
        %v2279 = vmul.f32 %v2209, %v2209
        %v2280 = vadd.f32 %v2248, %v2249
        %v2281 = vadd.f32 %v2280, %v2250
        %v2282 = vadd.f32 %v2281, %v2251
        %v2283 = vadd.f32 %v2282, %v2252
        %v2284 = vadd.f32 %v2283, %v2253
        %v2285 = vadd.f32 %v2284, %v2254
        %v2286 = vadd.f32 %v2285, %v2255
        %v2287 = vadd.f32 %v2286, %v2256
        %v2288 = vadd.f32 %v2287, %v2257
        %v2289 = vadd.f32 %v2288, %v2258
        %v2290 = vadd.f32 %v2289, %v2259
        %v2291 = vadd.f32 %v2290, %v2260
        %v2292 = vadd.f32 %v2291, %v2261
        %v2293 = vadd.f32 %v2292, %v2262
        %v2294 = vadd.f32 %v2293, %v2263
        %v2295 = vadd.f32 %v2294, %v2264
        %v2296 = vadd.f32 %v2295, %v2265
        %v2297 = vadd.f32 %v2296, %v2266
        %v2298 = vadd.f32 %v2297, %v2267
        %v2299 = vadd.f32 %v2298, %v2268
        %v2300 = vadd.f32 %v2299, %v2269
        %v2301 = vadd.f32 %v2300, %v2270
        %v2302 = vadd.f32 %v2301, %v2271
        %v2303 = vadd.f32 %v2302, %v2272
        %v2304 = vadd.f32 %v2303, %v2273
        %v2305 = vadd.f32 %v2304, %v2274
        %v2306 = vadd.f32 %v2305, %v2275
        %v2307 = vadd.f32 %v2306, %v2276
        %v2308 = vadd.f32 %v2307, %v2277
        %v2309 = vadd.f32 %v2308, %v2278
        %v2310 = vadd.f32 %v2309, %v2279
        %v2311 = vrot.slane %v2310, 4
        %v2312 = vadd.f32 %v2310, %v2311
        %v2313 = vrot.slane %v2312, 2
        %v2314 = vadd.f32 %v2312, %v2313
        %v2315 = vrot.slane %v2314, 1
        %v2316 = vadd.f32 %v2314, %v2315
        %2317 = vst [vmem:[%s136 + $0x1] sm:$0x1] %v2316
        %s2318 = sand.u32 %s71, 1
        %s2319 = scalar_lea.sflag [#allocation3], %s2318
        %s2320 = sand.u32 %s71, 1
        %s2321 = smul.addr %s2320, 2
        %s2322 = scalar_lea.vmem [#allocation2], %s2321
        // Predicated region
        $region29: #{tpu_custom_call.1} parent=27 // pred_check
          %p2323 = pneg %p81
        $region30: #{tpu_custom_call.1} parent=27 // pred_check_branch
          %2325 = sbr.rel (%p2323) target = $region32
        $region31: #{tpu_custom_call.1} parent=27 // pred_region
          %2327 = vsyncadd %s2319, 0
          %s2328 = smul.addr %s16, 2
          %s2329 = scalar_lea.hbm %s2, %s2328
          %s2331 = sshll.u32 %s2322, 4
          %s2332 = int_to_ptr.vmem [resolvable:$true] %s2331
          %s2333 = sshll.u32 %s2329, 4
          %s2334 = int_to_ptr.hbm [resolvable:$true] %s2333
          %2336 = dma.vmem_to_hbm [thread:$0]  %s2332, 32, %s2334, %s2319
        $region32: #{tpu_custom_call.1} parent=27 // pred_fallthru
          _
      $region28: #{tpu_custom_call.1} parent=5 // pred_fallthru
        _
      %p2337 = scmp.le.s32.totalorder 2, %s11
      // Predicated region
      $region33: #{tpu_custom_call.1} parent=5 // pred_check
        %p2338 = pneg %p2337
      $region34: #{tpu_custom_call.1} parent=5 // pred_check_branch
        %2340 = sbr.rel (%p2338) target = $region36
      $region35: #{tpu_custom_call.1} parent=5 // pred_region
        %s2341 = ssub.s32 %s11, 2
        // Predicated region
        $region37: #{tpu_custom_call.1} parent=35 // pred_check
          %p2342 = pneg %p87
        $region38: #{tpu_custom_call.1} parent=35 // pred_check_branch
          %2344 = sbr.rel (%p2342) target = $region40
        $region39: #{tpu_custom_call.1} parent=35 // pred_region
          %s2345 = sand.u32 %s72, 1
          %s2346 = scalar_lea.sflag [#allocation3], %s2345
          %s2347 = sand.u32 %s72, 1
          %s2348 = smul.addr %s2347, 2
          %s2349 = scalar_lea.vmem [#allocation2], %s2348
          %2351 = dma.done %s2346, 32
        $region40: #{tpu_custom_call.1} parent=35 // pred_fallthru
          _
      $region36: #{tpu_custom_call.1} parent=5 // pred_fallthru
        _
    $region6: #{tpu_custom_call.1} parent=1 // loop_footer
      %s15 = sadd.s32 1, %s11
    $region7: #{tpu_custom_call.1} parent=1 // loop_footer_branch
      %10 = sbr.rel target = $region3
    $region8: #{tpu_custom_call.1} parent=1 // loop_exit
      _
    %2352 = vsyncpa [#allocation3], 1
    %s2353 = scalar_lea.sflag [#allocation3], 1
    %2354 = vsyncpa %s2353, 1

</llo_original>
